<compile_context>
chip_gen: v6e
topology: v6e:2x2x1
jax: 0.10.0
libtpu: 0.0.40
codegen_flags: <defaults>
</compile_context>

<pallas_src>
import functools

import jax
import jax.numpy as jnp
from jax.experimental import pallas as pl
from jax.experimental.pallas import tpu as pltpu


# ----------------------------------------------------------------------------
# helpers
# ----------------------------------------------------------------------------
def _pick_lane_tile(M, C, bytes_per_buf=1 << 19):
    """Largest lane tile that is a multiple of 128, divides M and keeps a
    (C, tile) f32 buffer under bytes_per_buf; falls back to the full dim."""
    max_lanes = max(128, bytes_per_buf // (4 * max(C, 1)))
    t = (min(M, max_lanes) // 128) * 128
    while t >= 128:
        if M % t == 0:
            return t
        t -= 128
    return M


def _conv1x1(x, w, b):
    """1x1 conv in lane-major layout: x (Cin, T), w (Cout, Cin), b (Cout, 1)."""
    cin = w.shape[1]
    if cin <= 16:
        # VPU unrolled MAC: MXU would be almost entirely idle at this K.
        acc = b + w[:, 0:1] * x[0:1, :]
        for c in range(1, cin):
            acc = acc + w[:, c:c + 1] * x[c:c + 1, :]
        return acc
    return jnp.dot(w.astype(jnp.bfloat16), x.astype(jnp.bfloat16),
                   preferred_element_type=jnp.float32) + b


def _matvec(w, x):
    """w (O, I) @ x (I, 1) -> (O, 1), VPU-unrolled (tiny SE MLP)."""
    acc = w[:, 0:1] * x[0:1, :]
    for i in range(1, w.shape[1]):
        acc = acc + w[:, i:i + 1] * x[i:i + 1, :]
    return acc


# ----------------------------------------------------------------------------
# Kernel 1: fused pre1 / pre2 convs (+ 1e-8)
# ----------------------------------------------------------------------------
def _pre_kernel(ms_ref, pan_ref, w1_ref, b1_ref, w2_ref, b2_ref,
                oms_ref, opan_ref):
    oms_ref[0] = _conv1x1(ms_ref[0], w1_ref[...], b1_ref[...]) + 1e-8
    opan_ref[0] = _conv1x1(pan_ref[0], w2_ref[...], b2_ref[...]) + 1e-8


# ----------------------------------------------------------------------------
# Kernel 2: SE path.  Amplitude + GAP reduction over the freq-spatial axis,
# then the tiny SE MLPs (Linear->ReLU->Linear->Sigmoid, no bias) at the last
# reduction step; y_ms gets +1.0, y_pan gets +0.5 (per the PyTorch forward).
# ----------------------------------------------------------------------------
def _se_kernel(msr_ref, msi_ref, panr_ref, pani_ref,
               w1m_ref, w2m_ref, w1p_ref, w2p_ref,
               yms_ref, ypan_ref, accm_ref, accp_ref, *, inv_mf):
    j = pl.program_id(1)

    @pl.when(j == 0)
    def _():
        accm_ref[...] = jnp.zeros_like(accm_ref)
        accp_ref[...] = jnp.zeros_like(accp_ref)

    mr, mi = msr_ref[0], msi_ref[0]
    pr, pi = panr_ref[0], pani_ref[0]
    amp_ms = jnp.sqrt(mr * mr + mi * mi)
    amp_pan = jnp.sqrt(pr * pr + pi * pi)
    accm_ref[...] += jnp.sum(amp_ms, axis=1, keepdims=True)
    accp_ref[...] += jnp.sum(amp_pan, axis=1, keepdims=True)

    @pl.when(j == pl.num_programs(1) - 1)
    def _():
        def se(acc, w1, w2):
            gap = acc * inv_mf                          # (C, 1)
            h = jnp.maximum(_matvec(w1, gap), 0.0)      # (L, 1)
            z = _matvec(w2, h)                          # (C, 1)
            return 1.0 / (1.0 + jnp.exp(-z))            # sigmoid

        yms_ref[0] = se(accm_ref[...], w1m_ref[...], w2m_ref[...]) + 1.0
        ypan_ref[0] = se(accp_ref[...], w1p_ref[...], w2p_ref[...]) + 0.5


# ----------------------------------------------------------------------------
# Kernel 3: fused frequency branch.
#   amp = |msF| * y_ms + |panF| * y_pan ; pha = angle(msF) + angle(panF)
#   amp_fuse / pha_fuse (conv -> LeakyReLU(0.1) -> conv), cos/sin recombine.
# ----------------------------------------------------------------------------
def _fuse_kernel(msr_ref, msi_ref, panr_ref, pani_ref, mspha_ref, panpha_ref,
                 yms_ref, ypan_ref,
                 wa1_ref, ba1_ref, wa2_ref, ba2_ref,
                 wp1_ref, bp1_ref, wp2_ref, bp2_ref,
                 ore_ref, oim_ref):
    mr, mi = msr_ref[0], msi_ref[0]
    pr, pi = panr_ref[0], pani_ref[0]
    amp_ms = jnp.sqrt(mr * mr + mi * mi) * yms_ref[0]
    amp_pan = jnp.sqrt(pr * pr + pi * pi) * ypan_ref[0]
    a = amp_ms + amp_pan
    p = mspha_ref[0] + panpha_ref[0]

    def stack(x, w1, b1, w2, b2):
        h = _conv1x1(x, w1, b1)
        h = jnp.maximum(h, 0.1 * h)                     # LeakyReLU(0.1)
        return _conv1x1(h, w2, b2)

    amp_f = stack(a, wa1_ref[...], ba1_ref[...], wa2_ref[...], ba2_ref[...])
    pha_f = stack(p, wp1_ref[...], bp1_ref[...], wp2_ref[...], bp2_ref[...])

    # torch: complex(amp*cos + 1e-8, amp*sin + 1e-8) + 1e-8  (the +1e-8 on a
    # complex adds to the real part only)
    ore_ref[0] = amp_f * jnp.cos(pha_f) + 2e-8
    oim_ref[0] = amp_f * jnp.sin(pha_f) + 1e-8


# ----------------------------------------------------------------------------
# Kernel 4: |x| then post conv
# ----------------------------------------------------------------------------
def _post_kernel(x_ref, w_ref, b_ref, o_ref):
    o_ref[0] = _conv1x1(jnp.abs(x_ref[0]), w_ref[...], b_ref[...])


# ----------------------------------------------------------------------------
# Full forward pass
# ----------------------------------------------------------------------------
def fre_fusion_selective_se(msf, panf, p):
    N, C, H, W = msf.shape
    M = H * W
    Wf = W // 2 + 1
    Mf = H * Wf
    f32 = jnp.float32

    TM = _pick_lane_tile(M, C)
    TMf = _pick_lane_tile(Mf, C)

    def x_spec(t):
        return pl.BlockSpec((1, C, t), lambda n, j: (n, 0, j))

    def w_spec(shape):
        return pl.BlockSpec(shape, lambda n, j: (0, 0))

    y_spec = pl.BlockSpec((1, C, 1), lambda n, j: (n, 0, 0))
    par2 = pltpu.CompilerParams(dimension_semantics=("parallel", "parallel"))

    # ---- fused pre convs -------------------------------------------------
    pre_ms, pre_pan = pl.pallas_call(
        _pre_kernel,
        grid=(N, M // TM),
        in_specs=[x_spec(TM), x_spec(TM),
                  w_spec((C, C)), w_spec((C, 1)),
                  w_spec((C, C)), w_spec((C, 1))],
        out_specs=[x_spec(TM), x_spec(TM)],
        out_shape=[jax.ShapeDtypeStruct((N, C, M), f32),
                   jax.ShapeDtypeStruct((N, C, M), f32)],
        compiler_params=par2,
    )(msf.reshape(N, C, M), panf.reshape(N, C, M),
      p["w_pre1"], p["b_pre1"], p["w_pre2"], p["b_pre2"])

    # ---- FFT (glue) ------------------------------------------------------
    # TODO(synk): rfft2/irfft2 and torch.angle (atan2) have no Pallas TPU
    # primitive; computed with jnp.fft / jnp.angle here.
    msF = jnp.fft.rfft2(pre_ms.reshape(N, C, H, W), norm="backward")
    panF = jnp.fft.rfft2(pre_pan.reshape(N, C, H, W), norm="backward")

    ms_re = msF.real.reshape(N, C, Mf)
    ms_im = msF.imag.reshape(N, C, Mf)
    pan_re = panF.real.reshape(N, C, Mf)
    pan_im = panF.imag.reshape(N, C, Mf)
    ms_pha = jnp.angle(msF).reshape(N, C, Mf)
    pan_pha = jnp.angle(panF).reshape(N, C, Mf)

    # ---- SE scales (amp GAP reduction + tiny MLPs) -----------------------
    L = p["w1_ms"].shape[0]
    y_ms, y_pan = pl.pallas_call(
        functools.partial(_se_kernel, inv_mf=1.0 / float(Mf)),
        grid=(N, Mf // TMf),
        in_specs=[x_spec(TMf), x_spec(TMf), x_spec(TMf), x_spec(TMf),
                  w_spec((L, C)), w_spec((C, L)),
                  w_spec((L, C)), w_spec((C, L))],
        out_specs=[y_spec, y_spec],
        out_shape=[jax.ShapeDtypeStruct((N, C, 1), f32),
                   jax.ShapeDtypeStruct((N, C, 1), f32)],
        scratch_shapes=[pltpu.VMEM((C, 1), f32), pltpu.VMEM((C, 1), f32)],
        compiler_params=pltpu.CompilerParams(
            dimension_semantics=("parallel", "arbitrary")),
    )(ms_re, ms_im, pan_re, pan_im,
      p["w1_ms"], p["w2_ms"], p["w1_pan"], p["w2_pan"])

    # ---- fused frequency branch ------------------------------------------
    out_re, out_im = pl.pallas_call(
        _fuse_kernel,
        grid=(N, Mf // TMf),
        in_specs=[x_spec(TMf)] * 6 + [y_spec, y_spec]
        + [w_spec((C, C)), w_spec((C, 1)), w_spec((C, C)), w_spec((C, 1)),
           w_spec((C, C)), w_spec((C, 1)), w_spec((C, C)), w_spec((C, 1))],
        out_specs=[x_spec(TMf), x_spec(TMf)],
        out_shape=[jax.ShapeDtypeStruct((N, C, Mf), f32),
                   jax.ShapeDtypeStruct((N, C, Mf), f32)],
        compiler_params=par2,
    )(ms_re, ms_im, pan_re, pan_im, ms_pha, pan_pha, y_ms, y_pan,
      p["wa1"], p["ba1"], p["wa2"], p["ba2"],
      p["wp1"], p["bp1"], p["wp2"], p["bp2"])

    spatial = jnp.fft.irfft2(
        jax.lax.complex(out_re.reshape(N, C, H, Wf),
                        out_im.reshape(N, C, H, Wf)),
        s=(H, W), norm="backward")

    # ---- |x| + post conv --------------------------------------------------
    out = pl.pallas_call(
        _post_kernel,
        grid=(N, M // TM),
        in_specs=[x_spec(TM), w_spec((C, C)), w_spec((C, 1))],
        out_specs=x_spec(TM),
        out_shape=jax.ShapeDtypeStruct((N, C, M), f32),
        compiler_params=par2,
    )(spatial.reshape(N, C, M), p["w_post"], p["b_post"])

    return out.reshape(N, C, H, W)


# ----------------------------------------------------------------------------
# Deterministic parameters.  Conv weights are (Cout, Cin) (matches the squeezed
# nn.Conv2d(c, c, 1) weight), biases are (Cout, 1); SE weights are (L, C) and
# (C, L) (matches nn.Linear weight layout, bias=False).
# ----------------------------------------------------------------------------
def init_params(key, C, L=8):
    ks = jax.random.split(key, 18)

    def w(k, o, i):
        return jax.random.normal(k, (o, i), jnp.float32) / jnp.sqrt(i)

    def b(k, o):
        return 0.1 * jax.random.normal(k, (o, 1), jnp.float32)

    return dict(
        w_pre1=w(ks[0], C, C), b_pre1=b(ks[1], C),
        w_pre2=w(ks[2], C, C), b_pre2=b(ks[3], C),
        wa1=w(ks[4], C, C), ba1=b(ks[5], C),
        wa2=w(ks[6], C, C), ba2=b(ks[7], C),
        wp1=w(ks[8], C, C), bp1=b(ks[9], C),
        wp2=w(ks[10], C, C), bp2=b(ks[11], C),
        w_post=w(ks[12], C, C), b_post=b(ks[13], C),
        w1_ms=w(ks[14], L, C), w2_ms=w(ks[15], C, L),
        w1_pan=w(ks[16], L, C), w2_pan=w(ks[17], C, L),
    )


# ----------------------------------------------------------------------------
# Pure-JAX reference of the PyTorch forward (for correctness check)
# ----------------------------------------------------------------------------
def reference(msf, panf, p):
    hp = jax.lax.Precision.HIGHEST

    def conv(x, w, b):
        return (jnp.einsum("nchw,oc->nohw", x, w, precision=hp)
                + b.reshape(1, -1, 1, 1))

    def lrelu(x):
        return jnp.where(x >= 0, x, 0.1 * x)

    def se(amp, w1, w2):
        gap = jnp.mean(amp, axis=(2, 3))                              # (N, C)
        h = jnp.maximum(jnp.einsum("nc,lc->nl", gap, w1, precision=hp), 0.0)
        z = jnp.einsum("nl,cl->nc", h, w2, precision=hp)
        return jax.nn.sigmoid(z)[:, :, None, None]

    H, W = msf.shape[2], msf.shape[3]
    msF = jnp.fft.rfft2(conv(msf, p["w_pre1"], p["b_pre1"]) + 1e-8,
                        norm="backward")
    panF = jnp.fft.rfft2(conv(panf, p["w_pre2"], p["b_pre2"]) + 1e-8,
                         norm="backward")
    ms_amp, ms_pha = jnp.abs(msF), jnp.angle(msF)
    pan_amp, pan_pha = jnp.abs(panF), jnp.angle(panF)
    ms_amp = ms_amp * (se(ms_amp, p["w1_ms"], p["w2_ms"]) + 1.0)
    pan_amp = pan_amp * (se(pan_amp, p["w1_pan"], p["w2_pan"]) + 0.5)
    amp_f = conv(lrelu(conv(ms_amp + pan_amp, p["wa1"], p["ba1"])),
                 p["wa2"], p["ba2"])
    pha_f = conv(lrelu(conv(ms_pha + pan_pha, p["wp1"], p["bp1"])),
                 p["wp2"], p["bp2"])
    real = amp_f * jnp.cos(pha_f) + 1e-8 + 1e-8
    imag = amp_f * jnp.sin(pha_f) + 1e-8
    out = jnp.abs(jnp.fft.irfft2(jax.lax.complex(real, imag), s=(H, W),
                                 norm="backward"))
    return conv(out, p["w_post"], p["b_post"])


if __name__ == "__main__":
    key = jax.random.PRNGKey(0)
    kp, k1, k2 = jax.random.split(key, 3)
    N, C, H, W = 2, 4, 16, 16
    msf = jax.random.normal(k1, (N, C, H, W), jnp.float32)
    panf = jax.random.normal(k2, (N, C, H, W), jnp.float32)
    params = init_params(kp, C)

    out = jax.jit(fre_fusion_selective_se)(msf, panf, params)
    out = jax.block_until_ready(out)
    assert out.shape == (N, C, H, W)

    ref = reference(msf, panf, params)
    err = float(jnp.max(jnp.abs(out - ref)))
    tol = 5e-3 * (1.0 + float(jnp.max(jnp.abs(ref))))
    if not err < tol:
        raise AssertionError(f"mismatch vs reference: max abs err {err}")
    print("KERNEL_OK")
</pallas_src>

<mosaic_0001>
module attributes {stable_mosaic.version = 11 : i64} {
  func.func @_pre_kernel(%arg0: i32, %arg1: i32, %arg2: memref<1x4x256xf32, #tpu.memory_space<vmem>>, %arg3: memref<1x4x256xf32, #tpu.memory_space<vmem>>, %arg4: memref<4x4xf32, #tpu.memory_space<vmem>>, %arg5: memref<4x1xf32, #tpu.memory_space<vmem>>, %arg6: memref<4x4xf32, #tpu.memory_space<vmem>>, %arg7: memref<4x1xf32, #tpu.memory_space<vmem>>, %arg8: memref<1x4x256xf32, #tpu.memory_space<vmem>>, %arg9: memref<1x4x256xf32, #tpu.memory_space<vmem>>) attributes {dimension_semantics = [#tpu.dimension_semantics<parallel>, #tpu.dimension_semantics<parallel>], iteration_bounds = array<i64: 2, 1>, scalar_prefetch = 0 : i64, scratch_operands = 0 : i64, tpu.core_type = #tpu.core_type<tc>, window_params = [{transform_indices = @transform_0, window_bounds = array<i64: 1, 4, 256>}, {transform_indices = @transform_1, window_bounds = array<i64: 1, 4, 256>}, {pipeline_mode = #tpu.pipeline_mode<synchronous>, transform_indices = @transform_2, window_bounds = array<i64: 4, 4>}, {pipeline_mode = #tpu.pipeline_mode<synchronous>, transform_indices = @transform_3, window_bounds = array<i64: 4, 1>}, {pipeline_mode = #tpu.pipeline_mode<synchronous>, transform_indices = @transform_4, window_bounds = array<i64: 4, 4>}, {pipeline_mode = #tpu.pipeline_mode<synchronous>, transform_indices = @transform_5, window_bounds = array<i64: 4, 1>}, {transform_indices = @transform_6, window_bounds = array<i64: 1, 4, 256>}, {transform_indices = @transform_7, window_bounds = array<i64: 1, 4, 256>}]} {
    %c0 = arith.constant 0 : index
    %c0_0 = arith.constant 0 : index
    %c0_1 = arith.constant 0 : index
    %0 = vector.load %arg2[%c0, %c0_0, %c0_1] : memref<1x4x256xf32, #tpu.memory_space<vmem>>, vector<1x4x256xf32>
    %1 = vector.shape_cast %0 : vector<1x4x256xf32> to vector<4x256xf32>
    %c0_2 = arith.constant 0 : index
    %c0_3 = arith.constant 0 : index
    %2 = vector.load %arg4[%c0_2, %c0_3] : memref<4x4xf32, #tpu.memory_space<vmem>>, vector<4x4xf32>
    %c0_4 = arith.constant 0 : index
    %c0_5 = arith.constant 0 : index
    %3 = vector.load %arg5[%c0_4, %c0_5] : memref<4x1xf32, #tpu.memory_space<vmem>>, vector<4x1xf32>
    %4 = vector.extract_strided_slice %2 {offsets = [0, 0], sizes = [4, 1], strides = [1, 1]} : vector<4x4xf32> to vector<4x1xf32>
    %5 = vector.extract_strided_slice %1 {offsets = [0, 0], sizes = [1, 256], strides = [1, 1]} : vector<4x256xf32> to vector<1x256xf32>
    %6 = vector.broadcast %4 : vector<4x1xf32> to vector<4x256xf32>
    %7 = vector.broadcast %5 : vector<1x256xf32> to vector<4x256xf32>
    %8 = arith.mulf %6, %7 : vector<4x256xf32>
    %9 = vector.broadcast %3 : vector<4x1xf32> to vector<4x256xf32>
    %10 = arith.addf %9, %8 : vector<4x256xf32>
    %11 = vector.extract_strided_slice %2 {offsets = [0, 1], sizes = [4, 1], strides = [1, 1]} : vector<4x4xf32> to vector<4x1xf32>
    %12 = vector.extract_strided_slice %1 {offsets = [1, 0], sizes = [1, 256], strides = [1, 1]} : vector<4x256xf32> to vector<1x256xf32>
    %13 = vector.broadcast %11 : vector<4x1xf32> to vector<4x256xf32>
    %14 = vector.broadcast %12 : vector<1x256xf32> to vector<4x256xf32>
    %15 = arith.mulf %13, %14 : vector<4x256xf32>
    %16 = arith.addf %10, %15 : vector<4x256xf32>
    %17 = vector.extract_strided_slice %2 {offsets = [0, 2], sizes = [4, 1], strides = [1, 1]} : vector<4x4xf32> to vector<4x1xf32>
    %18 = vector.extract_strided_slice %1 {offsets = [2, 0], sizes = [1, 256], strides = [1, 1]} : vector<4x256xf32> to vector<1x256xf32>
    %19 = vector.broadcast %17 : vector<4x1xf32> to vector<4x256xf32>
    %20 = vector.broadcast %18 : vector<1x256xf32> to vector<4x256xf32>
    %21 = arith.mulf %19, %20 : vector<4x256xf32>
    %22 = arith.addf %16, %21 : vector<4x256xf32>
    %23 = vector.extract_strided_slice %2 {offsets = [0, 3], sizes = [4, 1], strides = [1, 1]} : vector<4x4xf32> to vector<4x1xf32>
    %24 = vector.extract_strided_slice %1 {offsets = [3, 0], sizes = [1, 256], strides = [1, 1]} : vector<4x256xf32> to vector<1x256xf32>
    %25 = vector.broadcast %23 : vector<4x1xf32> to vector<4x256xf32>
    %26 = vector.broadcast %24 : vector<1x256xf32> to vector<4x256xf32>
    %27 = arith.mulf %25, %26 : vector<4x256xf32>
    %28 = arith.addf %22, %27 : vector<4x256xf32>
    %cst = arith.constant 9.99999993E-9 : f32
    %29 = vector.broadcast %cst : f32 to vector<4x256xf32>
    %30 = arith.addf %28, %29 : vector<4x256xf32>
    %c0_6 = arith.constant 0 : index
    %c0_7 = arith.constant 0 : index
    %c0_8 = arith.constant 0 : index
    %31 = vector.load %arg8[%c0_6, %c0_7, %c0_8] : memref<1x4x256xf32, #tpu.memory_space<vmem>>, vector<1x4x256xf32>
    %32 = vector.shape_cast %31 : vector<1x4x256xf32> to vector<4x256xf32>
    %33 = vector.shape_cast %30 : vector<4x256xf32> to vector<1x4x256xf32>
    tpu.vector_store %arg8[%c0_6, %c0_7, %c0_8], %33 {strides = array<i32>} : memref<1x4x256xf32, #tpu.memory_space<vmem>>, vector<1x4x256xf32>,
    %c0_9 = arith.constant 0 : index
    %c0_10 = arith.constant 0 : index
    %c0_11 = arith.constant 0 : index
    %34 = vector.load %arg3[%c0_9, %c0_10, %c0_11] : memref<1x4x256xf32, #tpu.memory_space<vmem>>, vector<1x4x256xf32>
    %35 = vector.shape_cast %34 : vector<1x4x256xf32> to vector<4x256xf32>
    %c0_12 = arith.constant 0 : index
    %c0_13 = arith.constant 0 : index
    %36 = vector.load %arg6[%c0_12, %c0_13] : memref<4x4xf32, #tpu.memory_space<vmem>>, vector<4x4xf32>
    %c0_14 = arith.constant 0 : index
    %c0_15 = arith.constant 0 : index
    %37 = vector.load %arg7[%c0_14, %c0_15] : memref<4x1xf32, #tpu.memory_space<vmem>>, vector<4x1xf32>
    %38 = vector.extract_strided_slice %36 {offsets = [0, 0], sizes = [4, 1], strides = [1, 1]} : vector<4x4xf32> to vector<4x1xf32>
    %39 = vector.extract_strided_slice %35 {offsets = [0, 0], sizes = [1, 256], strides = [1, 1]} : vector<4x256xf32> to vector<1x256xf32>
    %40 = vector.broadcast %38 : vector<4x1xf32> to vector<4x256xf32>
    %41 = vector.broadcast %39 : vector<1x256xf32> to vector<4x256xf32>
    %42 = arith.mulf %40, %41 : vector<4x256xf32>
    %43 = vector.broadcast %37 : vector<4x1xf32> to vector<4x256xf32>
    %44 = arith.addf %43, %42 : vector<4x256xf32>
    %45 = vector.extract_strided_slice %36 {offsets = [0, 1], sizes = [4, 1], strides = [1, 1]} : vector<4x4xf32> to vector<4x1xf32>
    %46 = vector.extract_strided_slice %35 {offsets = [1, 0], sizes = [1, 256], strides = [1, 1]} : vector<4x256xf32> to vector<1x256xf32>
    %47 = vector.broadcast %45 : vector<4x1xf32> to vector<4x256xf32>
    %48 = vector.broadcast %46 : vector<1x256xf32> to vector<4x256xf32>
    %49 = arith.mulf %47, %48 : vector<4x256xf32>
    %50 = arith.addf %44, %49 : vector<4x256xf32>
    %51 = vector.extract_strided_slice %36 {offsets = [0, 2], sizes = [4, 1], strides = [1, 1]} : vector<4x4xf32> to vector<4x1xf32>
    %52 = vector.extract_strided_slice %35 {offsets = [2, 0], sizes = [1, 256], strides = [1, 1]} : vector<4x256xf32> to vector<1x256xf32>
    %53 = vector.broadcast %51 : vector<4x1xf32> to vector<4x256xf32>
    %54 = vector.broadcast %52 : vector<1x256xf32> to vector<4x256xf32>
    %55 = arith.mulf %53, %54 : vector<4x256xf32>
    %56 = arith.addf %50, %55 : vector<4x256xf32>
    %57 = vector.extract_strided_slice %36 {offsets = [0, 3], sizes = [4, 1], strides = [1, 1]} : vector<4x4xf32> to vector<4x1xf32>
    %58 = vector.extract_strided_slice %35 {offsets = [3, 0], sizes = [1, 256], strides = [1, 1]} : vector<4x256xf32> to vector<1x256xf32>
    %59 = vector.broadcast %57 : vector<4x1xf32> to vector<4x256xf32>
    %60 = vector.broadcast %58 : vector<1x256xf32> to vector<4x256xf32>
    %61 = arith.mulf %59, %60 : vector<4x256xf32>
    %62 = arith.addf %56, %61 : vector<4x256xf32>
    %cst_16 = arith.constant 9.99999993E-9 : f32
    %63 = vector.broadcast %cst_16 : f32 to vector<4x256xf32>
    %64 = arith.addf %62, %63 : vector<4x256xf32>
    %c0_17 = arith.constant 0 : index
    %c0_18 = arith.constant 0 : index
    %c0_19 = arith.constant 0 : index
    %65 = vector.load %arg9[%c0_17, %c0_18, %c0_19] : memref<1x4x256xf32, #tpu.memory_space<vmem>>, vector<1x4x256xf32>
    %66 = vector.shape_cast %65 : vector<1x4x256xf32> to vector<4x256xf32>
    %67 = vector.shape_cast %64 : vector<4x256xf32> to vector<1x4x256xf32>
    tpu.vector_store %arg9[%c0_17, %c0_18, %c0_19], %67 {strides = array<i32>} : memref<1x4x256xf32, #tpu.memory_space<vmem>>, vector<1x4x256xf32>,
    return
  }
  func.func @transform_0(%arg0: i32, %arg1: i32) -> (i32, i32, i32) {
    %c0_i32 = arith.constant 0 : i32
    %c0_i32_0 = arith.constant 0 : i32
    return %arg0, %c0_i32, %arg1 : i32, i32, i32
  }
  func.func @transform_1(%arg0: i32, %arg1: i32) -> (i32, i32, i32) {
    %c0_i32 = arith.constant 0 : i32
    %c0_i32_0 = arith.constant 0 : i32
    return %arg0, %c0_i32, %arg1 : i32, i32, i32
  }
  func.func @transform_2(%arg0: i32, %arg1: i32) -> (i32, i32) {
    %c0_i32 = arith.constant 0 : i32
    %c0_i32_0 = arith.constant 0 : i32
    %c0_i32_1 = arith.constant 0 : i32
    return %c0_i32, %c0_i32_0 : i32, i32
  }
  func.func @transform_3(%arg0: i32, %arg1: i32) -> (i32, i32) {
    %c0_i32 = arith.constant 0 : i32
    %c0_i32_0 = arith.constant 0 : i32
    %c0_i32_1 = arith.constant 0 : i32
    return %c0_i32, %c0_i32_0 : i32, i32
  }
  func.func @transform_4(%arg0: i32, %arg1: i32) -> (i32, i32) {
    %c0_i32 = arith.constant 0 : i32
    %c0_i32_0 = arith.constant 0 : i32
    %c0_i32_1 = arith.constant 0 : i32
    return %c0_i32, %c0_i32_0 : i32, i32
  }
  func.func @transform_5(%arg0: i32, %arg1: i32) -> (i32, i32) {
    %c0_i32 = arith.constant 0 : i32
    %c0_i32_0 = arith.constant 0 : i32
    %c0_i32_1 = arith.constant 0 : i32
    return %c0_i32, %c0_i32_0 : i32, i32
  }
  func.func @transform_6(%arg0: i32, %arg1: i32) -> (i32, i32, i32) {
    %c0_i32 = arith.constant 0 : i32
    %c0_i32_0 = arith.constant 0 : i32
    return %arg0, %c0_i32, %arg1 : i32, i32, i32
  }
  func.func @transform_7(%arg0: i32, %arg1: i32) -> (i32, i32, i32) {
    %c0_i32 = arith.constant 0 : i32
    %c0_i32_0 = arith.constant 0 : i32
    return %arg0, %c0_i32, %arg1 : i32, i32, i32
  }
}

module attributes {stable_mosaic.version = 11 : i64} {
  func.func @_se_kernel(%arg0: i32, %arg1: i32, %arg2: memref<1x4x144xf32, #tpu.memory_space<vmem>>, %arg3: memref<1x4x144xf32, #tpu.memory_space<vmem>>, %arg4: memref<1x4x144xf32, #tpu.memory_space<vmem>>, %arg5: memref<1x4x144xf32, #tpu.memory_space<vmem>>, %arg6: memref<8x4xf32, #tpu.memory_space<vmem>>, %arg7: memref<4x8xf32, #tpu.memory_space<vmem>>, %arg8: memref<8x4xf32, #tpu.memory_space<vmem>>, %arg9: memref<4x8xf32, #tpu.memory_space<vmem>>, %arg10: memref<1x4x1xf32, #tpu.memory_space<vmem>>, %arg11: memref<1x4x1xf32, #tpu.memory_space<vmem>>, %arg12: memref<4x1xf32, #tpu.memory_space<vmem>>, %arg13: memref<4x1xf32, #tpu.memory_space<vmem>>) attributes {dimension_semantics = [#tpu.dimension_semantics<parallel>, #tpu.dimension_semantics<arbitrary>], iteration_bounds = array<i64: 2, 1>, scalar_prefetch = 0 : i64, scratch_operands = 2 : i64, tpu.core_type = #tpu.core_type<tc>, window_params = [{transform_indices = @transform_0, window_bounds = array<i64: 1, 4, 144>}, {transform_indices = @transform_1, window_bounds = array<i64: 1, 4, 144>}, {transform_indices = @transform_2, window_bounds = array<i64: 1, 4, 144>}, {transform_indices = @transform_3, window_bounds = array<i64: 1, 4, 144>}, {pipeline_mode = #tpu.pipeline_mode<synchronous>, transform_indices = @transform_4, window_bounds = array<i64: 8, 4>}, {pipeline_mode = #tpu.pipeline_mode<synchronous>, transform_indices = @transform_5, window_bounds = array<i64: 4, 8>}, {pipeline_mode = #tpu.pipeline_mode<synchronous>, transform_indices = @transform_6, window_bounds = array<i64: 8, 4>}, {pipeline_mode = #tpu.pipeline_mode<synchronous>, transform_indices = @transform_7, window_bounds = array<i64: 4, 8>}, {transform_indices = @transform_8, window_bounds = array<i64: 1, 4, 1>}, {transform_indices = @transform_9, window_bounds = array<i64: 1, 4, 1>}]} {
    %c0_i32 = arith.constant 0 : i32
    %0 = arith.cmpi eq, %arg1, %c0_i32 : i32
    %1 = arith.extui %0 : i1 to i32
    %c0_i32_0 = arith.constant 0 : i32
    %2 = arith.cmpi ne, %1, %c0_i32_0 : i32
    scf.if %2 {
      %cst_23 = arith.constant 0.000000e+00 : f32
      %32 = vector.broadcast %cst_23 : f32 to vector<4x1xf32>
      %c0_24 = arith.constant 0 : index
      %c0_25 = arith.constant 0 : index
      %33 = vector.load %arg12[%c0_24, %c0_25] : memref<4x1xf32, #tpu.memory_space<vmem>>, vector<4x1xf32>
      tpu.vector_store %arg12[%c0_24, %c0_25], %32 {strides = array<i32>} : memref<4x1xf32, #tpu.memory_space<vmem>>, vector<4x1xf32>,
      %cst_26 = arith.constant 0.000000e+00 : f32
      %34 = vector.broadcast %cst_26 : f32 to vector<4x1xf32>
      %c0_27 = arith.constant 0 : index
      %c0_28 = arith.constant 0 : index
      %35 = vector.load %arg13[%c0_27, %c0_28] : memref<4x1xf32, #tpu.memory_space<vmem>>, vector<4x1xf32>
      tpu.vector_store %arg13[%c0_27, %c0_28], %34 {strides = array<i32>} : memref<4x1xf32, #tpu.memory_space<vmem>>, vector<4x1xf32>,
    } else {
    }
    %c0 = arith.constant 0 : index
    %c0_1 = arith.constant 0 : index
    %c0_2 = arith.constant 0 : index
    %3 = vector.load %arg2[%c0, %c0_1, %c0_2] : memref<1x4x144xf32, #tpu.memory_space<vmem>>, vector<1x4x144xf32>
    %4 = vector.shape_cast %3 : vector<1x4x144xf32> to vector<4x144xf32>
    %c0_3 = arith.constant 0 : index
    %c0_4 = arith.constant 0 : index
    %c0_5 = arith.constant 0 : index
    %5 = vector.load %arg3[%c0_3, %c0_4, %c0_5] : memref<1x4x144xf32, #tpu.memory_space<vmem>>, vector<1x4x144xf32>
    %6 = vector.shape_cast %5 : vector<1x4x144xf32> to vector<4x144xf32>
    %c0_6 = arith.constant 0 : index
    %c0_7 = arith.constant 0 : index
    %c0_8 = arith.constant 0 : index
    %7 = vector.load %arg4[%c0_6, %c0_7, %c0_8] : memref<1x4x144xf32, #tpu.memory_space<vmem>>, vector<1x4x144xf32>
    %8 = vector.shape_cast %7 : vector<1x4x144xf32> to vector<4x144xf32>
    %c0_9 = arith.constant 0 : index
    %c0_10 = arith.constant 0 : index
    %c0_11 = arith.constant 0 : index
    %9 = vector.load %arg5[%c0_9, %c0_10, %c0_11] : memref<1x4x144xf32, #tpu.memory_space<vmem>>, vector<1x4x144xf32>
    %10 = vector.shape_cast %9 : vector<1x4x144xf32> to vector<4x144xf32>
    %11 = arith.mulf %4, %4 : vector<4x144xf32>
    %12 = arith.mulf %6, %6 : vector<4x144xf32>
    %13 = arith.addf %11, %12 : vector<4x144xf32>
    %14 = math.sqrt %13 : vector<4x144xf32>
    %15 = arith.mulf %8, %8 : vector<4x144xf32>
    %16 = arith.mulf %10, %10 : vector<4x144xf32>
    %17 = arith.addf %15, %16 : vector<4x144xf32>
    %18 = math.sqrt %17 : vector<4x144xf32>
    %c0_12 = arith.constant 0 : index
    %c0_13 = arith.constant 0 : index
    %19 = vector.load %arg12[%c0_12, %c0_13] : memref<4x1xf32, #tpu.memory_space<vmem>>, vector<4x1xf32>
    %cst = arith.constant dense<0.000000e+00> : vector<4xf32>
    %20 = vector.multi_reduction <add>, %14, %cst [1] : vector<4x144xf32> to vector<4xf32>
    %21 = vector.shape_cast %20 : vector<4xf32> to vector<4x1xf32>
    %22 = arith.addf %19, %21 : vector<4x1xf32>
    %c0_14 = arith.constant 0 : index
    %c0_15 = arith.constant 0 : index
    %23 = vector.load %arg12[%c0_14, %c0_15] : memref<4x1xf32, #tpu.memory_space<vmem>>, vector<4x1xf32>
    tpu.vector_store %arg12[%c0_14, %c0_15], %22 {strides = array<i32>} : memref<4x1xf32, #tpu.memory_space<vmem>>, vector<4x1xf32>,
    %c0_16 = arith.constant 0 : index
    %c0_17 = arith.constant 0 : index
    %24 = vector.load %arg13[%c0_16, %c0_17] : memref<4x1xf32, #tpu.memory_space<vmem>>, vector<4x1xf32>
    %cst_18 = arith.constant dense<0.000000e+00> : vector<4xf32>
    %25 = vector.multi_reduction <add>, %18, %cst_18 [1] : vector<4x144xf32> to vector<4xf32>
    %26 = vector.shape_cast %25 : vector<4xf32> to vector<4x1xf32>
    %27 = arith.addf %24, %26 : vector<4x1xf32>
    %c0_19 = arith.constant 0 : index
    %c0_20 = arith.constant 0 : index
    %28 = vector.load %arg13[%c0_19, %c0_20] : memref<4x1xf32, #tpu.memory_space<vmem>>, vector<4x1xf32>
    tpu.vector_store %arg13[%c0_19, %c0_20], %27 {strides = array<i32>} : memref<4x1xf32, #tpu.memory_space<vmem>>, vector<4x1xf32>,
    %c0_i32_21 = arith.constant 0 : i32
    %29 = arith.cmpi eq, %arg1, %c0_i32_21 : i32
    %30 = arith.extui %29 : i1 to i32
    %c0_i32_22 = arith.constant 0 : i32
    %31 = arith.cmpi ne, %30, %c0_i32_22 : i32
    scf.if %31 {
      %c0_23 = arith.constant 0 : index
      %c0_24 = arith.constant 0 : index
      %32 = vector.load %arg12[%c0_23, %c0_24] : memref<4x1xf32, #tpu.memory_space<vmem>>, vector<4x1xf32>
      %c0_25 = arith.constant 0 : index
      %c0_26 = arith.constant 0 : index
      %33 = vector.load %arg6[%c0_25, %c0_26] : memref<8x4xf32, #tpu.memory_space<vmem>>, vector<8x4xf32>
      %c0_27 = arith.constant 0 : index
      %c0_28 = arith.constant 0 : index
      %34 = vector.load %arg7[%c0_27, %c0_28] : memref<4x8xf32, #tpu.memory_space<vmem>>, vector<4x8xf32>
      %cst_29 = arith.constant 0.0069444445 : f32
      %35 = vector.broadcast %cst_29 : f32 to vector<4x1xf32>
      %36 = arith.mulf %32, %35 : vector<4x1xf32>
      %37 = vector.extract_strided_slice %33 {offsets = [0, 0], sizes = [8, 1], strides = [1, 1]} : vector<8x4xf32> to vector<8x1xf32>
      %38 = vector.extract_strided_slice %36 {offsets = [0, 0], sizes = [1, 1], strides = [1, 1]} : vector<4x1xf32> to vector<1x1xf32>
      %39 = vector.broadcast %38 : vector<1x1xf32> to vector<8x1xf32>
      %40 = arith.mulf %37, %39 : vector<8x1xf32>
      %41 = vector.extract_strided_slice %33 {offsets = [0, 1], sizes = [8, 1], strides = [1, 1]} : vector<8x4xf32> to vector<8x1xf32>
      %42 = vector.extract_strided_slice %36 {offsets = [1, 0], sizes = [1, 1], strides = [1, 1]} : vector<4x1xf32> to vector<1x1xf32>
      %43 = vector.broadcast %42 : vector<1x1xf32> to vector<8x1xf32>
      %44 = arith.mulf %41, %43 : vector<8x1xf32>
      %45 = arith.addf %40, %44 : vector<8x1xf32>
      %46 = vector.extract_strided_slice %33 {offsets = [0, 2], sizes = [8, 1], strides = [1, 1]} : vector<8x4xf32> to vector<8x1xf32>
      %47 = vector.extract_strided_slice %36 {offsets = [2, 0], sizes = [1, 1], strides = [1, 1]} : vector<4x1xf32> to vector<1x1xf32>
      %48 = vector.broadcast %47 : vector<1x1xf32> to vector<8x1xf32>
      %49 = arith.mulf %46, %48 : vector<8x1xf32>
      %50 = arith.addf %45, %49 : vector<8x1xf32>
      %51 = vector.extract_strided_slice %33 {offsets = [0, 3], sizes = [8, 1], strides = [1, 1]} : vector<8x4xf32> to vector<8x1xf32>
      %52 = vector.extract_strided_slice %36 {offsets = [3, 0], sizes = [1, 1], strides = [1, 1]} : vector<4x1xf32> to vector<1x1xf32>
      %53 = vector.broadcast %52 : vector<1x1xf32> to vector<8x1xf32>
      %54 = arith.mulf %51, %53 : vector<8x1xf32>
      %55 = arith.addf %50, %54 : vector<8x1xf32>
      %cst_30 = arith.constant 0.000000e+00 : f32
      %56 = vector.broadcast %cst_30 : f32 to vector<8x1xf32>
      %57 = arith.maximumf %55, %56 : vector<8x1xf32>
      %58 = vector.extract_strided_slice %34 {offsets = [0, 0], sizes = [4, 1], strides = [1, 1]} : vector<4x8xf32> to vector<4x1xf32>
      %59 = vector.extract_strided_slice %57 {offsets = [0, 0], sizes = [1, 1], strides = [1, 1]} : vector<8x1xf32> to vector<1x1xf32>
      %60 = vector.broadcast %59 : vector<1x1xf32> to vector<4x1xf32>
      %61 = arith.mulf %58, %60 : vector<4x1xf32>
      %62 = vector.extract_strided_slice %34 {offsets = [0, 1], sizes = [4, 1], strides = [1, 1]} : vector<4x8xf32> to vector<4x1xf32>
      %63 = vector.extract_strided_slice %57 {offsets = [1, 0], sizes = [1, 1], strides = [1, 1]} : vector<8x1xf32> to vector<1x1xf32>
      %64 = vector.broadcast %63 : vector<1x1xf32> to vector<4x1xf32>
      %65 = arith.mulf %62, %64 : vector<4x1xf32>
      %66 = arith.addf %61, %65 : vector<4x1xf32>
      %67 = vector.extract_strided_slice %34 {offsets = [0, 2], sizes = [4, 1], strides = [1, 1]} : vector<4x8xf32> to vector<4x1xf32>
      %68 = vector.extract_strided_slice %57 {offsets = [2, 0], sizes = [1, 1], strides = [1, 1]} : vector<8x1xf32> to vector<1x1xf32>
      %69 = vector.broadcast %68 : vector<1x1xf32> to vector<4x1xf32>
      %70 = arith.mulf %67, %69 : vector<4x1xf32>
      %71 = arith.addf %66, %70 : vector<4x1xf32>
      %72 = vector.extract_strided_slice %34 {offsets = [0, 3], sizes = [4, 1], strides = [1, 1]} : vector<4x8xf32> to vector<4x1xf32>
      %73 = vector.extract_strided_slice %57 {offsets = [3, 0], sizes = [1, 1], strides = [1, 1]} : vector<8x1xf32> to vector<1x1xf32>
      %74 = vector.broadcast %73 : vector<1x1xf32> to vector<4x1xf32>
      %75 = arith.mulf %72, %74 : vector<4x1xf32>
      %76 = arith.addf %71, %75 : vector<4x1xf32>
      %77 = vector.extract_strided_slice %34 {offsets = [0, 4], sizes = [4, 1], strides = [1, 1]} : vector<4x8xf32> to vector<4x1xf32>
      %78 = vector.extract_strided_slice %57 {offsets = [4, 0], sizes = [1, 1], strides = [1, 1]} : vector<8x1xf32> to vector<1x1xf32>
      %79 = vector.broadcast %78 : vector<1x1xf32> to vector<4x1xf32>
      %80 = arith.mulf %77, %79 : vector<4x1xf32>
      %81 = arith.addf %76, %80 : vector<4x1xf32>
      %82 = vector.extract_strided_slice %34 {offsets = [0, 5], sizes = [4, 1], strides = [1, 1]} : vector<4x8xf32> to vector<4x1xf32>
      %83 = vector.extract_strided_slice %57 {offsets = [5, 0], sizes = [1, 1], strides = [1, 1]} : vector<8x1xf32> to vector<1x1xf32>
      %84 = vector.broadcast %83 : vector<1x1xf32> to vector<4x1xf32>
      %85 = arith.mulf %82, %84 : vector<4x1xf32>
      %86 = arith.addf %81, %85 : vector<4x1xf32>
      %87 = vector.extract_strided_slice %34 {offsets = [0, 6], sizes = [4, 1], strides = [1, 1]} : vector<4x8xf32> to vector<4x1xf32>
      %88 = vector.extract_strided_slice %57 {offsets = [6, 0], sizes = [1, 1], strides = [1, 1]} : vector<8x1xf32> to vector<1x1xf32>
      %89 = vector.broadcast %88 : vector<1x1xf32> to vector<4x1xf32>
      %90 = arith.mulf %87, %89 : vector<4x1xf32>
      %91 = arith.addf %86, %90 : vector<4x1xf32>
      %92 = vector.extract_strided_slice %34 {offsets = [0, 7], sizes = [4, 1], strides = [1, 1]} : vector<4x8xf32> to vector<4x1xf32>
      %93 = vector.extract_strided_slice %57 {offsets = [7, 0], sizes = [1, 1], strides = [1, 1]} : vector<8x1xf32> to vector<1x1xf32>
      %94 = vector.broadcast %93 : vector<1x1xf32> to vector<4x1xf32>
      %95 = arith.mulf %92, %94 : vector<4x1xf32>
      %96 = arith.addf %91, %95 : vector<4x1xf32>
      %cst_31 = arith.constant 0.000000e+00 : f32
      %97 = vector.broadcast %cst_31 : f32 to vector<4x1xf32>
      %98 = arith.subf %97, %96 : vector<4x1xf32>
      %99 = math.exp %98 : vector<4x1xf32>
      %cst_32 = arith.constant 1.000000e+00 : f32
      %100 = vector.broadcast %cst_32 : f32 to vector<4x1xf32>
      %101 = arith.addf %100, %99 : vector<4x1xf32>
      %cst_33 = arith.constant 1.000000e+00 : f32
      %102 = vector.broadcast %cst_33 : f32 to vector<4x1xf32>
      %103 = arith.divf %102, %101 : vector<4x1xf32>
      %cst_34 = arith.constant 1.000000e+00 : f32
      %104 = vector.broadcast %cst_34 : f32 to vector<4x1xf32>
      %105 = arith.addf %103, %104 : vector<4x1xf32>
      %c0_35 = arith.constant 0 : index
      %c0_36 = arith.constant 0 : index
      %c0_37 = arith.constant 0 : index
      %106 = vector.load %arg10[%c0_35, %c0_36, %c0_37] : memref<1x4x1xf32, #tpu.memory_space<vmem>>, vector<1x4x1xf32>
      %107 = vector.shape_cast %106 : vector<1x4x1xf32> to vector<4x1xf32>
      %108 = vector.shape_cast %105 : vector<4x1xf32> to vector<1x4x1xf32>
      tpu.vector_store %arg10[%c0_35, %c0_36, %c0_37], %108 {strides = array<i32>} : memref<1x4x1xf32, #tpu.memory_space<vmem>>, vector<1x4x1xf32>,
      %c0_38 = arith.constant 0 : index
      %c0_39 = arith.constant 0 : index
      %109 = vector.load %arg13[%c0_38, %c0_39] : memref<4x1xf32, #tpu.memory_space<vmem>>, vector<4x1xf32>
      %c0_40 = arith.constant 0 : index
      %c0_41 = arith.constant 0 : index
      %110 = vector.load %arg8[%c0_40, %c0_41] : memref<8x4xf32, #tpu.memory_space<vmem>>, vector<8x4xf32>
      %c0_42 = arith.constant 0 : index
      %c0_43 = arith.constant 0 : index
      %111 = vector.load %arg9[%c0_42, %c0_43] : memref<4x8xf32, #tpu.memory_space<vmem>>, vector<4x8xf32>
      %cst_44 = arith.constant 0.0069444445 : f32
      %112 = vector.broadcast %cst_44 : f32 to vector<4x1xf32>
      %113 = arith.mulf %109, %112 : vector<4x1xf32>
      %114 = vector.extract_strided_slice %110 {offsets = [0, 0], sizes = [8, 1], strides = [1, 1]} : vector<8x4xf32> to vector<8x1xf32>
      %115 = vector.extract_strided_slice %113 {offsets = [0, 0], sizes = [1, 1], strides = [1, 1]} : vector<4x1xf32> to vector<1x1xf32>
      %116 = vector.broadcast %115 : vector<1x1xf32> to vector<8x1xf32>
      %117 = arith.mulf %114, %116 : vector<8x1xf32>
      %118 = vector.extract_strided_slice %110 {offsets = [0, 1], sizes = [8, 1], strides = [1, 1]} : vector<8x4xf32> to vector<8x1xf32>
      %119 = vector.extract_strided_slice %113 {offsets = [1, 0], sizes = [1, 1], strides = [1, 1]} : vector<4x1xf32> to vector<1x1xf32>
      %120 = vector.broadcast %119 : vector<1x1xf32> to vector<8x1xf32>
      %121 = arith.mulf %118, %120 : vector<8x1xf32>
      %122 = arith.addf %117, %121 : vector<8x1xf32>
      %123 = vector.extract_strided_slice %110 {offsets = [0, 2], sizes = [8, 1], strides = [1, 1]} : vector<8x4xf32> to vector<8x1xf32>
      %124 = vector.extract_strided_slice %113 {offsets = [2, 0], sizes = [1, 1], strides = [1, 1]} : vector<4x1xf32> to vector<1x1xf32>
      %125 = vector.broadcast %124 : vector<1x1xf32> to vector<8x1xf32>
      %126 = arith.mulf %123, %125 : vector<8x1xf32>
      %127 = arith.addf %122, %126 : vector<8x1xf32>
      %128 = vector.extract_strided_slice %110 {offsets = [0, 3], sizes = [8, 1], strides = [1, 1]} : vector<8x4xf32> to vector<8x1xf32>
      %129 = vector.extract_strided_slice %113 {offsets = [3, 0], sizes = [1, 1], strides = [1, 1]} : vector<4x1xf32> to vector<1x1xf32>
      %130 = vector.broadcast %129 : vector<1x1xf32> to vector<8x1xf32>
      %131 = arith.mulf %128, %130 : vector<8x1xf32>
      %132 = arith.addf %127, %131 : vector<8x1xf32>
      %cst_45 = arith.constant 0.000000e+00 : f32
      %133 = vector.broadcast %cst_45 : f32 to vector<8x1xf32>
      %134 = arith.maximumf %132, %133 : vector<8x1xf32>
      %135 = vector.extract_strided_slice %111 {offsets = [0, 0], sizes = [4, 1], strides = [1, 1]} : vector<4x8xf32> to vector<4x1xf32>
      %136 = vector.extract_strided_slice %134 {offsets = [0, 0], sizes = [1, 1], strides = [1, 1]} : vector<8x1xf32> to vector<1x1xf32>
      %137 = vector.broadcast %136 : vector<1x1xf32> to vector<4x1xf32>
      %138 = arith.mulf %135, %137 : vector<4x1xf32>
      %139 = vector.extract_strided_slice %111 {offsets = [0, 1], sizes = [4, 1], strides = [1, 1]} : vector<4x8xf32> to vector<4x1xf32>
      %140 = vector.extract_strided_slice %134 {offsets = [1, 0], sizes = [1, 1], strides = [1, 1]} : vector<8x1xf32> to vector<1x1xf32>
      %141 = vector.broadcast %140 : vector<1x1xf32> to vector<4x1xf32>
      %142 = arith.mulf %139, %141 : vector<4x1xf32>
      %143 = arith.addf %138, %142 : vector<4x1xf32>
      %144 = vector.extract_strided_slice %111 {offsets = [0, 2], sizes = [4, 1], strides = [1, 1]} : vector<4x8xf32> to vector<4x1xf32>
      %145 = vector.extract_strided_slice %134 {offsets = [2, 0], sizes = [1, 1], strides = [1, 1]} : vector<8x1xf32> to vector<1x1xf32>
      %146 = vector.broadcast %145 : vector<1x1xf32> to vector<4x1xf32>
      %147 = arith.mulf %144, %146 : vector<4x1xf32>
      %148 = arith.addf %143, %147 : vector<4x1xf32>
      %149 = vector.extract_strided_slice %111 {offsets = [0, 3], sizes = [4, 1], strides = [1, 1]} : vector<4x8xf32> to vector<4x1xf32>
      %150 = vector.extract_strided_slice %134 {offsets = [3, 0], sizes = [1, 1], strides = [1, 1]} : vector<8x1xf32> to vector<1x1xf32>
      %151 = vector.broadcast %150 : vector<1x1xf32> to vector<4x1xf32>
      %152 = arith.mulf %149, %151 : vector<4x1xf32>
      %153 = arith.addf %148, %152 : vector<4x1xf32>
      %154 = vector.extract_strided_slice %111 {offsets = [0, 4], sizes = [4, 1], strides = [1, 1]} : vector<4x8xf32> to vector<4x1xf32>
      %155 = vector.extract_strided_slice %134 {offsets = [4, 0], sizes = [1, 1], strides = [1, 1]} : vector<8x1xf32> to vector<1x1xf32>
      %156 = vector.broadcast %155 : vector<1x1xf32> to vector<4x1xf32>
      %157 = arith.mulf %154, %156 : vector<4x1xf32>
      %158 = arith.addf %153, %157 : vector<4x1xf32>
      %159 = vector.extract_strided_slice %111 {offsets = [0, 5], sizes = [4, 1], strides = [1, 1]} : vector<4x8xf32> to vector<4x1xf32>
      %160 = vector.extract_strided_slice %134 {offsets = [5, 0], sizes = [1, 1], strides = [1, 1]} : vector<8x1xf32> to vector<1x1xf32>
      %161 = vector.broadcast %160 : vector<1x1xf32> to vector<4x1xf32>
      %162 = arith.mulf %159, %161 : vector<4x1xf32>
      %163 = arith.addf %158, %162 : vector<4x1xf32>
      %164 = vector.extract_strided_slice %111 {offsets = [0, 6], sizes = [4, 1], strides = [1, 1]} : vector<4x8xf32> to vector<4x1xf32>
      %165 = vector.extract_strided_slice %134 {offsets = [6, 0], sizes = [1, 1], strides = [1, 1]} : vector<8x1xf32> to vector<1x1xf32>
      %166 = vector.broadcast %165 : vector<1x1xf32> to vector<4x1xf32>
      %167 = arith.mulf %164, %166 : vector<4x1xf32>
      %168 = arith.addf %163, %167 : vector<4x1xf32>
      %169 = vector.extract_strided_slice %111 {offsets = [0, 7], sizes = [4, 1], strides = [1, 1]} : vector<4x8xf32> to vector<4x1xf32>
      %170 = vector.extract_strided_slice %134 {offsets = [7, 0], sizes = [1, 1], strides = [1, 1]} : vector<8x1xf32> to vector<1x1xf32>
      %171 = vector.broadcast %170 : vector<1x1xf32> to vector<4x1xf32>
      %172 = arith.mulf %169, %171 : vector<4x1xf32>
      %173 = arith.addf %168, %172 : vector<4x1xf32>
      %cst_46 = arith.constant 0.000000e+00 : f32
      %174 = vector.broadcast %cst_46 : f32 to vector<4x1xf32>
      %175 = arith.subf %174, %173 : vector<4x1xf32>
      %176 = math.exp %175 : vector<4x1xf32>
      %cst_47 = arith.constant 1.000000e+00 : f32
      %177 = vector.broadcast %cst_47 : f32 to vector<4x1xf32>
      %178 = arith.addf %177, %176 : vector<4x1xf32>
      %cst_48 = arith.constant 1.000000e+00 : f32
      %179 = vector.broadcast %cst_48 : f32 to vector<4x1xf32>
      %180 = arith.divf %179, %178 : vector<4x1xf32>
      %cst_49 = arith.constant 5.000000e-01 : f32
      %181 = vector.broadcast %cst_49 : f32 to vector<4x1xf32>
      %182 = arith.addf %180, %181 : vector<4x1xf32>
      %c0_50 = arith.constant 0 : index
      %c0_51 = arith.constant 0 : index
      %c0_52 = arith.constant 0 : index
      %183 = vector.load %arg11[%c0_50, %c0_51, %c0_52] : memref<1x4x1xf32, #tpu.memory_space<vmem>>, vector<1x4x1xf32>
      %184 = vector.shape_cast %183 : vector<1x4x1xf32> to vector<4x1xf32>
      %185 = vector.shape_cast %182 : vector<4x1xf32> to vector<1x4x1xf32>
      tpu.vector_store %arg11[%c0_50, %c0_51, %c0_52], %185 {strides = array<i32>} : memref<1x4x1xf32, #tpu.memory_space<vmem>>, vector<1x4x1xf32>,
    } else {
    }
    return
  }
  func.func @transform_0(%arg0: i32, %arg1: i32) -> (i32, i32, i32) {
    %c0_i32 = arith.constant 0 : i32
    %c0_i32_0 = arith.constant 0 : i32
    return %arg0, %c0_i32, %arg1 : i32, i32, i32
  }
  func.func @transform_1(%arg0: i32, %arg1: i32) -> (i32, i32, i32) {
    %c0_i32 = arith.constant 0 : i32
    %c0_i32_0 = arith.constant 0 : i32
    return %arg0, %c0_i32, %arg1 : i32, i32, i32
  }
  func.func @transform_2(%arg0: i32, %arg1: i32) -> (i32, i32, i32) {
    %c0_i32 = arith.constant 0 : i32
    %c0_i32_0 = arith.constant 0 : i32
    return %arg0, %c0_i32, %arg1 : i32, i32, i32
  }
  func.func @transform_3(%arg0: i32, %arg1: i32) -> (i32, i32, i32) {
    %c0_i32 = arith.constant 0 : i32
    %c0_i32_0 = arith.constant 0 : i32
    return %arg0, %c0_i32, %arg1 : i32, i32, i32
  }
  func.func @transform_4(%arg0: i32, %arg1: i32) -> (i32, i32) {
    %c0_i32 = arith.constant 0 : i32
    %c0_i32_0 = arith.constant 0 : i32
    %c0_i32_1 = arith.constant 0 : i32
    return %c0_i32, %c0_i32_0 : i32, i32
  }
  func.func @transform_5(%arg0: i32, %arg1: i32) -> (i32, i32) {
    %c0_i32 = arith.constant 0 : i32
    %c0_i32_0 = arith.constant 0 : i32
    %c0_i32_1 = arith.constant 0 : i32
    return %c0_i32, %c0_i32_0 : i32, i32
  }
  func.func @transform_6(%arg0: i32, %arg1: i32) -> (i32, i32) {
    %c0_i32 = arith.constant 0 : i32
    %c0_i32_0 = arith.constant 0 : i32
    %c0_i32_1 = arith.constant 0 : i32
    return %c0_i32, %c0_i32_0 : i32, i32
  }
  func.func @transform_7(%arg0: i32, %arg1: i32) -> (i32, i32) {
    %c0_i32 = arith.constant 0 : i32
    %c0_i32_0 = arith.constant 0 : i32
    %c0_i32_1 = arith.constant 0 : i32
    return %c0_i32, %c0_i32_0 : i32, i32
  }
  func.func @transform_8(%arg0: i32, %arg1: i32) -> (i32, i32, i32) {
    %c0_i32 = arith.constant 0 : i32
    %c0_i32_0 = arith.constant 0 : i32
    %c0_i32_1 = arith.constant 0 : i32
    return %arg0, %c0_i32, %c0_i32_0 : i32, i32, i32
  }
  func.func @transform_9(%arg0: i32, %arg1: i32) -> (i32, i32, i32) {
    %c0_i32 = arith.constant 0 : i32
    %c0_i32_0 = arith.constant 0 : i32
    %c0_i32_1 = arith.constant 0 : i32
    return %arg0, %c0_i32, %c0_i32_0 : i32, i32, i32
  }
}

module attributes {stable_mosaic.version = 11 : i64} {
  func.func @_fuse_kernel(%arg0: i32, %arg1: i32, %arg2: memref<1x4x144xf32, #tpu.memory_space<vmem>>, %arg3: memref<1x4x144xf32, #tpu.memory_space<vmem>>, %arg4: memref<1x4x144xf32, #tpu.memory_space<vmem>>, %arg5: memref<1x4x144xf32, #tpu.memory_space<vmem>>, %arg6: memref<1x4x144xf32, #tpu.memory_space<vmem>>, %arg7: memref<1x4x144xf32, #tpu.memory_space<vmem>>, %arg8: memref<1x4x1xf32, #tpu.memory_space<vmem>>, %arg9: memref<1x4x1xf32, #tpu.memory_space<vmem>>, %arg10: memref<4x4xf32, #tpu.memory_space<vmem>>, %arg11: memref<4x1xf32, #tpu.memory_space<vmem>>, %arg12: memref<4x4xf32, #tpu.memory_space<vmem>>, %arg13: memref<4x1xf32, #tpu.memory_space<vmem>>, %arg14: memref<4x4xf32, #tpu.memory_space<vmem>>, %arg15: memref<4x1xf32, #tpu.memory_space<vmem>>, %arg16: memref<4x4xf32, #tpu.memory_space<vmem>>, %arg17: memref<4x1xf32, #tpu.memory_space<vmem>>, %arg18: memref<1x4x144xf32, #tpu.memory_space<vmem>>, %arg19: memref<1x4x144xf32, #tpu.memory_space<vmem>>) attributes {dimension_semantics = [#tpu.dimension_semantics<parallel>, #tpu.dimension_semantics<parallel>], iteration_bounds = array<i64: 2, 1>, scalar_prefetch = 0 : i64, scratch_operands = 0 : i64, tpu.core_type = #tpu.core_type<tc>, window_params = [{transform_indices = @transform_0, window_bounds = array<i64: 1, 4, 144>}, {transform_indices = @transform_1, window_bounds = array<i64: 1, 4, 144>}, {transform_indices = @transform_2, window_bounds = array<i64: 1, 4, 144>}, {transform_indices = @transform_3, window_bounds = array<i64: 1, 4, 144>}, {transform_indices = @transform_4, window_bounds = array<i64: 1, 4, 144>}, {transform_indices = @transform_5, window_bounds = array<i64: 1, 4, 144>}, {transform_indices = @transform_6, window_bounds = array<i64: 1, 4, 1>}, {transform_indices = @transform_7, window_bounds = array<i64: 1, 4, 1>}, {pipeline_mode = #tpu.pipeline_mode<synchronous>, transform_indices = @transform_8, window_bounds = array<i64: 4, 4>}, {pipeline_mode = #tpu.pipeline_mode<synchronous>, transform_indices = @transform_9, window_bounds = array<i64: 4, 1>}, {pipeline_mode = #tpu.pipeline_mode<synchronous>, transform_indices = @transform_10, window_bounds = array<i64: 4, 4>}, {pipeline_mode = #tpu.pipeline_mode<synchronous>, transform_indices = @transform_11, window_bounds = array<i64: 4, 1>}, {pipeline_mode = #tpu.pipeline_mode<synchronous>, transform_indices = @transform_12, window_bounds = array<i64: 4, 4>}, {pipeline_mode = #tpu.pipeline_mode<synchronous>, transform_indices = @transform_13, window_bounds = array<i64: 4, 1>}, {pipeline_mode = #tpu.pipeline_mode<synchronous>, transform_indices = @transform_14, window_bounds = array<i64: 4, 4>}, {pipeline_mode = #tpu.pipeline_mode<synchronous>, transform_indices = @transform_15, window_bounds = array<i64: 4, 1>}, {transform_indices = @transform_16, window_bounds = array<i64: 1, 4, 144>}, {transform_indices = @transform_17, window_bounds = array<i64: 1, 4, 144>}]} {
    %c0 = arith.constant 0 : index
    %c0_0 = arith.constant 0 : index
    %c0_1 = arith.constant 0 : index
    %0 = vector.load %arg2[%c0, %c0_0, %c0_1] : memref<1x4x144xf32, #tpu.memory_space<vmem>>, vector<1x4x144xf32>
    %1 = vector.shape_cast %0 : vector<1x4x144xf32> to vector<4x144xf32>
    %c0_2 = arith.constant 0 : index
    %c0_3 = arith.constant 0 : index
    %c0_4 = arith.constant 0 : index
    %2 = vector.load %arg3[%c0_2, %c0_3, %c0_4] : memref<1x4x144xf32, #tpu.memory_space<vmem>>, vector<1x4x144xf32>
    %3 = vector.shape_cast %2 : vector<1x4x144xf32> to vector<4x144xf32>
    %c0_5 = arith.constant 0 : index
    %c0_6 = arith.constant 0 : index
    %c0_7 = arith.constant 0 : index
    %4 = vector.load %arg4[%c0_5, %c0_6, %c0_7] : memref<1x4x144xf32, #tpu.memory_space<vmem>>, vector<1x4x144xf32>
    %5 = vector.shape_cast %4 : vector<1x4x144xf32> to vector<4x144xf32>
    %c0_8 = arith.constant 0 : index
    %c0_9 = arith.constant 0 : index
    %c0_10 = arith.constant 0 : index
    %6 = vector.load %arg5[%c0_8, %c0_9, %c0_10] : memref<1x4x144xf32, #tpu.memory_space<vmem>>, vector<1x4x144xf32>
    %7 = vector.shape_cast %6 : vector<1x4x144xf32> to vector<4x144xf32>
    %8 = arith.mulf %1, %1 : vector<4x144xf32>
    %9 = arith.mulf %3, %3 : vector<4x144xf32>
    %10 = arith.addf %8, %9 : vector<4x144xf32>
    %11 = math.sqrt %10 : vector<4x144xf32>
    %c0_11 = arith.constant 0 : index
    %c0_12 = arith.constant 0 : index
    %c0_13 = arith.constant 0 : index
    %12 = vector.load %arg8[%c0_11, %c0_12, %c0_13] : memref<1x4x1xf32, #tpu.memory_space<vmem>>, vector<1x4x1xf32>
    %13 = vector.shape_cast %12 : vector<1x4x1xf32> to vector<4x1xf32>
    %14 = vector.broadcast %13 : vector<4x1xf32> to vector<4x144xf32>
    %15 = arith.mulf %11, %14 : vector<4x144xf32>
    %16 = arith.mulf %5, %5 : vector<4x144xf32>
    %17 = arith.mulf %7, %7 : vector<4x144xf32>
    %18 = arith.addf %16, %17 : vector<4x144xf32>
    %19 = math.sqrt %18 : vector<4x144xf32>
    %c0_14 = arith.constant 0 : index
    %c0_15 = arith.constant 0 : index
    %c0_16 = arith.constant 0 : index
    %20 = vector.load %arg9[%c0_14, %c0_15, %c0_16] : memref<1x4x1xf32, #tpu.memory_space<vmem>>, vector<1x4x1xf32>
    %21 = vector.shape_cast %20 : vector<1x4x1xf32> to vector<4x1xf32>
    %22 = vector.broadcast %21 : vector<4x1xf32> to vector<4x144xf32>
    %23 = arith.mulf %19, %22 : vector<4x144xf32>
    %24 = arith.addf %15, %23 : vector<4x144xf32>
    %c0_17 = arith.constant 0 : index
    %c0_18 = arith.constant 0 : index
    %c0_19 = arith.constant 0 : index
    %25 = vector.load %arg6[%c0_17, %c0_18, %c0_19] : memref<1x4x144xf32, #tpu.memory_space<vmem>>, vector<1x4x144xf32>
    %26 = vector.shape_cast %25 : vector<1x4x144xf32> to vector<4x144xf32>
    %c0_20 = arith.constant 0 : index
    %c0_21 = arith.constant 0 : index
    %c0_22 = arith.constant 0 : index
    %27 = vector.load %arg7[%c0_20, %c0_21, %c0_22] : memref<1x4x144xf32, #tpu.memory_space<vmem>>, vector<1x4x144xf32>
    %28 = vector.shape_cast %27 : vector<1x4x144xf32> to vector<4x144xf32>
    %29 = arith.addf %26, %28 : vector<4x144xf32>
    %c0_23 = arith.constant 0 : index
    %c0_24 = arith.constant 0 : index
    %30 = vector.load %arg10[%c0_23, %c0_24] : memref<4x4xf32, #tpu.memory_space<vmem>>, vector<4x4xf32>
    %c0_25 = arith.constant 0 : index
    %c0_26 = arith.constant 0 : index
    %31 = vector.load %arg11[%c0_25, %c0_26] : memref<4x1xf32, #tpu.memory_space<vmem>>, vector<4x1xf32>
    %c0_27 = arith.constant 0 : index
    %c0_28 = arith.constant 0 : index
    %32 = vector.load %arg12[%c0_27, %c0_28] : memref<4x4xf32, #tpu.memory_space<vmem>>, vector<4x4xf32>
    %c0_29 = arith.constant 0 : index
    %c0_30 = arith.constant 0 : index
    %33 = vector.load %arg13[%c0_29, %c0_30] : memref<4x1xf32, #tpu.memory_space<vmem>>, vector<4x1xf32>
    %34 = vector.extract_strided_slice %30 {offsets = [0, 0], sizes = [4, 1], strides = [1, 1]} : vector<4x4xf32> to vector<4x1xf32>
    %35 = vector.extract_strided_slice %24 {offsets = [0, 0], sizes = [1, 144], strides = [1, 1]} : vector<4x144xf32> to vector<1x144xf32>
    %36 = vector.broadcast %34 : vector<4x1xf32> to vector<4x144xf32>
    %37 = vector.broadcast %35 : vector<1x144xf32> to vector<4x144xf32>
    %38 = arith.mulf %36, %37 : vector<4x144xf32>
    %39 = vector.broadcast %31 : vector<4x1xf32> to vector<4x144xf32>
    %40 = arith.addf %39, %38 : vector<4x144xf32>
    %41 = vector.extract_strided_slice %30 {offsets = [0, 1], sizes = [4, 1], strides = [1, 1]} : vector<4x4xf32> to vector<4x1xf32>
    %42 = vector.extract_strided_slice %24 {offsets = [1, 0], sizes = [1, 144], strides = [1, 1]} : vector<4x144xf32> to vector<1x144xf32>
    %43 = vector.broadcast %41 : vector<4x1xf32> to vector<4x144xf32>
    %44 = vector.broadcast %42 : vector<1x144xf32> to vector<4x144xf32>
    %45 = arith.mulf %43, %44 : vector<4x144xf32>
    %46 = arith.addf %40, %45 : vector<4x144xf32>
    %47 = vector.extract_strided_slice %30 {offsets = [0, 2], sizes = [4, 1], strides = [1, 1]} : vector<4x4xf32> to vector<4x1xf32>
    %48 = vector.extract_strided_slice %24 {offsets = [2, 0], sizes = [1, 144], strides = [1, 1]} : vector<4x144xf32> to vector<1x144xf32>
    %49 = vector.broadcast %47 : vector<4x1xf32> to vector<4x144xf32>
    %50 = vector.broadcast %48 : vector<1x144xf32> to vector<4x144xf32>
    %51 = arith.mulf %49, %50 : vector<4x144xf32>
    %52 = arith.addf %46, %51 : vector<4x144xf32>
    %53 = vector.extract_strided_slice %30 {offsets = [0, 3], sizes = [4, 1], strides = [1, 1]} : vector<4x4xf32> to vector<4x1xf32>
    %54 = vector.extract_strided_slice %24 {offsets = [3, 0], sizes = [1, 144], strides = [1, 1]} : vector<4x144xf32> to vector<1x144xf32>
    %55 = vector.broadcast %53 : vector<4x1xf32> to vector<4x144xf32>
    %56 = vector.broadcast %54 : vector<1x144xf32> to vector<4x144xf32>
    %57 = arith.mulf %55, %56 : vector<4x144xf32>
    %58 = arith.addf %52, %57 : vector<4x144xf32>
    %cst = arith.constant 1.000000e-01 : f32
    %59 = vector.broadcast %cst : f32 to vector<4x144xf32>
    %60 = arith.mulf %59, %58 : vector<4x144xf32>
    %61 = arith.maximumf %58, %60 : vector<4x144xf32>
    %62 = vector.extract_strided_slice %32 {offsets = [0, 0], sizes = [4, 1], strides = [1, 1]} : vector<4x4xf32> to vector<4x1xf32>
    %63 = vector.extract_strided_slice %61 {offsets = [0, 0], sizes = [1, 144], strides = [1, 1]} : vector<4x144xf32> to vector<1x144xf32>
    %64 = vector.broadcast %62 : vector<4x1xf32> to vector<4x144xf32>
    %65 = vector.broadcast %63 : vector<1x144xf32> to vector<4x144xf32>
    %66 = arith.mulf %64, %65 : vector<4x144xf32>
    %67 = vector.broadcast %33 : vector<4x1xf32> to vector<4x144xf32>
    %68 = arith.addf %67, %66 : vector<4x144xf32>
    %69 = vector.extract_strided_slice %32 {offsets = [0, 1], sizes = [4, 1], strides = [1, 1]} : vector<4x4xf32> to vector<4x1xf32>
    %70 = vector.extract_strided_slice %61 {offsets = [1, 0], sizes = [1, 144], strides = [1, 1]} : vector<4x144xf32> to vector<1x144xf32>
    %71 = vector.broadcast %69 : vector<4x1xf32> to vector<4x144xf32>
    %72 = vector.broadcast %70 : vector<1x144xf32> to vector<4x144xf32>
    %73 = arith.mulf %71, %72 : vector<4x144xf32>
    %74 = arith.addf %68, %73 : vector<4x144xf32>
    %75 = vector.extract_strided_slice %32 {offsets = [0, 2], sizes = [4, 1], strides = [1, 1]} : vector<4x4xf32> to vector<4x1xf32>
    %76 = vector.extract_strided_slice %61 {offsets = [2, 0], sizes = [1, 144], strides = [1, 1]} : vector<4x144xf32> to vector<1x144xf32>
    %77 = vector.broadcast %75 : vector<4x1xf32> to vector<4x144xf32>
    %78 = vector.broadcast %76 : vector<1x144xf32> to vector<4x144xf32>
    %79 = arith.mulf %77, %78 : vector<4x144xf32>
    %80 = arith.addf %74, %79 : vector<4x144xf32>
    %81 = vector.extract_strided_slice %32 {offsets = [0, 3], sizes = [4, 1], strides = [1, 1]} : vector<4x4xf32> to vector<4x1xf32>
    %82 = vector.extract_strided_slice %61 {offsets = [3, 0], sizes = [1, 144], strides = [1, 1]} : vector<4x144xf32> to vector<1x144xf32>
    %83 = vector.broadcast %81 : vector<4x1xf32> to vector<4x144xf32>
    %84 = vector.broadcast %82 : vector<1x144xf32> to vector<4x144xf32>
    %85 = arith.mulf %83, %84 : vector<4x144xf32>
    %86 = arith.addf %80, %85 : vector<4x144xf32>
    %c0_31 = arith.constant 0 : index
    %c0_32 = arith.constant 0 : index
    %87 = vector.load %arg14[%c0_31, %c0_32] : memref<4x4xf32, #tpu.memory_space<vmem>>, vector<4x4xf32>
    %c0_33 = arith.constant 0 : index
    %c0_34 = arith.constant 0 : index
    %88 = vector.load %arg15[%c0_33, %c0_34] : memref<4x1xf32, #tpu.memory_space<vmem>>, vector<4x1xf32>
    %c0_35 = arith.constant 0 : index
    %c0_36 = arith.constant 0 : index
    %89 = vector.load %arg16[%c0_35, %c0_36] : memref<4x4xf32, #tpu.memory_space<vmem>>, vector<4x4xf32>
    %c0_37 = arith.constant 0 : index
    %c0_38 = arith.constant 0 : index
    %90 = vector.load %arg17[%c0_37, %c0_38] : memref<4x1xf32, #tpu.memory_space<vmem>>, vector<4x1xf32>
    %91 = vector.extract_strided_slice %87 {offsets = [0, 0], sizes = [4, 1], strides = [1, 1]} : vector<4x4xf32> to vector<4x1xf32>
    %92 = vector.extract_strided_slice %29 {offsets = [0, 0], sizes = [1, 144], strides = [1, 1]} : vector<4x144xf32> to vector<1x144xf32>
    %93 = vector.broadcast %91 : vector<4x1xf32> to vector<4x144xf32>
    %94 = vector.broadcast %92 : vector<1x144xf32> to vector<4x144xf32>
    %95 = arith.mulf %93, %94 : vector<4x144xf32>
    %96 = vector.broadcast %88 : vector<4x1xf32> to vector<4x144xf32>
    %97 = arith.addf %96, %95 : vector<4x144xf32>
    %98 = vector.extract_strided_slice %87 {offsets = [0, 1], sizes = [4, 1], strides = [1, 1]} : vector<4x4xf32> to vector<4x1xf32>
    %99 = vector.extract_strided_slice %29 {offsets = [1, 0], sizes = [1, 144], strides = [1, 1]} : vector<4x144xf32> to vector<1x144xf32>
    %100 = vector.broadcast %98 : vector<4x1xf32> to vector<4x144xf32>
    %101 = vector.broadcast %99 : vector<1x144xf32> to vector<4x144xf32>
    %102 = arith.mulf %100, %101 : vector<4x144xf32>
    %103 = arith.addf %97, %102 : vector<4x144xf32>
    %104 = vector.extract_strided_slice %87 {offsets = [0, 2], sizes = [4, 1], strides = [1, 1]} : vector<4x4xf32> to vector<4x1xf32>
    %105 = vector.extract_strided_slice %29 {offsets = [2, 0], sizes = [1, 144], strides = [1, 1]} : vector<4x144xf32> to vector<1x144xf32>
    %106 = vector.broadcast %104 : vector<4x1xf32> to vector<4x144xf32>
    %107 = vector.broadcast %105 : vector<1x144xf32> to vector<4x144xf32>
    %108 = arith.mulf %106, %107 : vector<4x144xf32>
    %109 = arith.addf %103, %108 : vector<4x144xf32>
    %110 = vector.extract_strided_slice %87 {offsets = [0, 3], sizes = [4, 1], strides = [1, 1]} : vector<4x4xf32> to vector<4x1xf32>
    %111 = vector.extract_strided_slice %29 {offsets = [3, 0], sizes = [1, 144], strides = [1, 1]} : vector<4x144xf32> to vector<1x144xf32>
    %112 = vector.broadcast %110 : vector<4x1xf32> to vector<4x144xf32>
    %113 = vector.broadcast %111 : vector<1x144xf32> to vector<4x144xf32>
    %114 = arith.mulf %112, %113 : vector<4x144xf32>
    %115 = arith.addf %109, %114 : vector<4x144xf32>
    %cst_39 = arith.constant 1.000000e-01 : f32
    %116 = vector.broadcast %cst_39 : f32 to vector<4x144xf32>
    %117 = arith.mulf %116, %115 : vector<4x144xf32>
    %118 = arith.maximumf %115, %117 : vector<4x144xf32>
    %119 = vector.extract_strided_slice %89 {offsets = [0, 0], sizes = [4, 1], strides = [1, 1]} : vector<4x4xf32> to vector<4x1xf32>
    %120 = vector.extract_strided_slice %118 {offsets = [0, 0], sizes = [1, 144], strides = [1, 1]} : vector<4x144xf32> to vector<1x144xf32>
    %121 = vector.broadcast %119 : vector<4x1xf32> to vector<4x144xf32>
    %122 = vector.broadcast %120 : vector<1x144xf32> to vector<4x144xf32>
    %123 = arith.mulf %121, %122 : vector<4x144xf32>
    %124 = vector.broadcast %90 : vector<4x1xf32> to vector<4x144xf32>
    %125 = arith.addf %124, %123 : vector<4x144xf32>
    %126 = vector.extract_strided_slice %89 {offsets = [0, 1], sizes = [4, 1], strides = [1, 1]} : vector<4x4xf32> to vector<4x1xf32>
    %127 = vector.extract_strided_slice %118 {offsets = [1, 0], sizes = [1, 144], strides = [1, 1]} : vector<4x144xf32> to vector<1x144xf32>
    %128 = vector.broadcast %126 : vector<4x1xf32> to vector<4x144xf32>
    %129 = vector.broadcast %127 : vector<1x144xf32> to vector<4x144xf32>
    %130 = arith.mulf %128, %129 : vector<4x144xf32>
    %131 = arith.addf %125, %130 : vector<4x144xf32>
    %132 = vector.extract_strided_slice %89 {offsets = [0, 2], sizes = [4, 1], strides = [1, 1]} : vector<4x4xf32> to vector<4x1xf32>
    %133 = vector.extract_strided_slice %118 {offsets = [2, 0], sizes = [1, 144], strides = [1, 1]} : vector<4x144xf32> to vector<1x144xf32>
    %134 = vector.broadcast %132 : vector<4x1xf32> to vector<4x144xf32>
    %135 = vector.broadcast %133 : vector<1x144xf32> to vector<4x144xf32>
    %136 = arith.mulf %134, %135 : vector<4x144xf32>
    %137 = arith.addf %131, %136 : vector<4x144xf32>
    %138 = vector.extract_strided_slice %89 {offsets = [0, 3], sizes = [4, 1], strides = [1, 1]} : vector<4x4xf32> to vector<4x1xf32>
    %139 = vector.extract_strided_slice %118 {offsets = [3, 0], sizes = [1, 144], strides = [1, 1]} : vector<4x144xf32> to vector<1x144xf32>
    %140 = vector.broadcast %138 : vector<4x1xf32> to vector<4x144xf32>
    %141 = vector.broadcast %139 : vector<1x144xf32> to vector<4x144xf32>
    %142 = arith.mulf %140, %141 : vector<4x144xf32>
    %143 = arith.addf %137, %142 : vector<4x144xf32>
    %144 = math.cos %143 : vector<4x144xf32>
    %145 = arith.mulf %86, %144 : vector<4x144xf32>
    %cst_40 = arith.constant 2.000000e-08 : f32
    %146 = vector.broadcast %cst_40 : f32 to vector<4x144xf32>
    %147 = arith.addf %145, %146 : vector<4x144xf32>
    %c0_41 = arith.constant 0 : index
    %c0_42 = arith.constant 0 : index
    %c0_43 = arith.constant 0 : index
    %148 = vector.load %arg18[%c0_41, %c0_42, %c0_43] : memref<1x4x144xf32, #tpu.memory_space<vmem>>, vector<1x4x144xf32>
    %149 = vector.shape_cast %148 : vector<1x4x144xf32> to vector<4x144xf32>
    %150 = vector.shape_cast %147 : vector<4x144xf32> to vector<1x4x144xf32>
    tpu.vector_store %arg18[%c0_41, %c0_42, %c0_43], %150 {strides = array<i32>} : memref<1x4x144xf32, #tpu.memory_space<vmem>>, vector<1x4x144xf32>,
    %151 = math.sin %143 : vector<4x144xf32>
    %152 = arith.mulf %86, %151 : vector<4x144xf32>
    %cst_44 = arith.constant 9.99999993E-9 : f32
    %153 = vector.broadcast %cst_44 : f32 to vector<4x144xf32>
    %154 = arith.addf %152, %153 : vector<4x144xf32>
    %c0_45 = arith.constant 0 : index
    %c0_46 = arith.constant 0 : index
    %c0_47 = arith.constant 0 : index
    %155 = vector.load %arg19[%c0_45, %c0_46, %c0_47] : memref<1x4x144xf32, #tpu.memory_space<vmem>>, vector<1x4x144xf32>
    %156 = vector.shape_cast %155 : vector<1x4x144xf32> to vector<4x144xf32>
    %157 = vector.shape_cast %154 : vector<4x144xf32> to vector<1x4x144xf32>
    tpu.vector_store %arg19[%c0_45, %c0_46, %c0_47], %157 {strides = array<i32>} : memref<1x4x144xf32, #tpu.memory_space<vmem>>, vector<1x4x144xf32>,
    return
  }
  func.func @transform_0(%arg0: i32, %arg1: i32) -> (i32, i32, i32) {
    %c0_i32 = arith.constant 0 : i32
    %c0_i32_0 = arith.constant 0 : i32
    return %arg0, %c0_i32, %arg1 : i32, i32, i32
  }
  func.func @transform_1(%arg0: i32, %arg1: i32) -> (i32, i32, i32) {
    %c0_i32 = arith.constant 0 : i32
    %c0_i32_0 = arith.constant 0 : i32
    return %arg0, %c0_i32, %arg1 : i32, i32, i32
  }
  func.func @transform_2(%arg0: i32, %arg1: i32) -> (i32, i32, i32) {
    %c0_i32 = arith.constant 0 : i32
    %c0_i32_0 = arith.constant 0 : i32
    return %arg0, %c0_i32, %arg1 : i32, i32, i32
  }
  func.func @transform_3(%arg0: i32, %arg1: i32) -> (i32, i32, i32) {
    %c0_i32 = arith.constant 0 : i32
    %c0_i32_0 = arith.constant 0 : i32
    return %arg0, %c0_i32, %arg1 : i32, i32, i32
  }
  func.func @transform_4(%arg0: i32, %arg1: i32) -> (i32, i32, i32) {
    %c0_i32 = arith.constant 0 : i32
    %c0_i32_0 = arith.constant 0 : i32
    return %arg0, %c0_i32, %arg1 : i32, i32, i32
  }
  func.func @transform_5(%arg0: i32, %arg1: i32) -> (i32, i32, i32) {
    %c0_i32 = arith.constant 0 : i32
    %c0_i32_0 = arith.constant 0 : i32
    return %arg0, %c0_i32, %arg1 : i32, i32, i32
  }
  func.func @transform_6(%arg0: i32, %arg1: i32) -> (i32, i32, i32) {
    %c0_i32 = arith.constant 0 : i32
    %c0_i32_0 = arith.constant 0 : i32
    %c0_i32_1 = arith.constant 0 : i32
    return %arg0, %c0_i32, %c0_i32_0 : i32, i32, i32
  }
  func.func @transform_7(%arg0: i32, %arg1: i32) -> (i32, i32, i32) {
    %c0_i32 = arith.constant 0 : i32
    %c0_i32_0 = arith.constant 0 : i32
    %c0_i32_1 = arith.constant 0 : i32
    return %arg0, %c0_i32, %c0_i32_0 : i32, i32, i32
  }
  func.func @transform_8(%arg0: i32, %arg1: i32) -> (i32, i32) {
    %c0_i32 = arith.constant 0 : i32
    %c0_i32_0 = arith.constant 0 : i32
    %c0_i32_1 = arith.constant 0 : i32
    return %c0_i32, %c0_i32_0 : i32, i32
  }
  func.func @transform_9(%arg0: i32, %arg1: i32) -> (i32, i32) {
    %c0_i32 = arith.constant 0 : i32
    %c0_i32_0 = arith.constant 0 : i32
    %c0_i32_1 = arith.constant 0 : i32
    return %c0_i32, %c0_i32_0 : i32, i32
  }
  func.func @transform_10(%arg0: i32, %arg1: i32) -> (i32, i32) {
    %c0_i32 = arith.constant 0 : i32
    %c0_i32_0 = arith.constant 0 : i32
    %c0_i32_1 = arith.constant 0 : i32
    return %c0_i32, %c0_i32_0 : i32, i32
  }
  func.func @transform_11(%arg0: i32, %arg1: i32) -> (i32, i32) {
    %c0_i32 = arith.constant 0 : i32
    %c0_i32_0 = arith.constant 0 : i32
    %c0_i32_1 = arith.constant 0 : i32
    return %c0_i32, %c0_i32_0 : i32, i32
  }
  func.func @transform_12(%arg0: i32, %arg1: i32) -> (i32, i32) {
    %c0_i32 = arith.constant 0 : i32
    %c0_i32_0 = arith.constant 0 : i32
    %c0_i32_1 = arith.constant 0 : i32
    return %c0_i32, %c0_i32_0 : i32, i32
  }
  func.func @transform_13(%arg0: i32, %arg1: i32) -> (i32, i32) {
    %c0_i32 = arith.constant 0 : i32
    %c0_i32_0 = arith.constant 0 : i32
    %c0_i32_1 = arith.constant 0 : i32
    return %c0_i32, %c0_i32_0 : i32, i32
  }
  func.func @transform_14(%arg0: i32, %arg1: i32) -> (i32, i32) {
    %c0_i32 = arith.constant 0 : i32
    %c0_i32_0 = arith.constant 0 : i32
    %c0_i32_1 = arith.constant 0 : i32
    return %c0_i32, %c0_i32_0 : i32, i32
  }
  func.func @transform_15(%arg0: i32, %arg1: i32) -> (i32, i32) {
    %c0_i32 = arith.constant 0 : i32
    %c0_i32_0 = arith.constant 0 : i32
    %c0_i32_1 = arith.constant 0 : i32
    return %c0_i32, %c0_i32_0 : i32, i32
  }
  func.func @transform_16(%arg0: i32, %arg1: i32) -> (i32, i32, i32) {
    %c0_i32 = arith.constant 0 : i32
    %c0_i32_0 = arith.constant 0 : i32
    return %arg0, %c0_i32, %arg1 : i32, i32, i32
  }
  func.func @transform_17(%arg0: i32, %arg1: i32) -> (i32, i32, i32) {
    %c0_i32 = arith.constant 0 : i32
    %c0_i32_0 = arith.constant 0 : i32
    return %arg0, %c0_i32, %arg1 : i32, i32, i32
  }
}

module attributes {stable_mosaic.version = 11 : i64} {
  func.func @_post_kernel(%arg0: i32, %arg1: i32, %arg2: memref<1x4x256xf32, #tpu.memory_space<vmem>>, %arg3: memref<4x4xf32, #tpu.memory_space<vmem>>, %arg4: memref<4x1xf32, #tpu.memory_space<vmem>>, %arg5: memref<1x4x256xf32, #tpu.memory_space<vmem>>) attributes {dimension_semantics = [#tpu.dimension_semantics<parallel>, #tpu.dimension_semantics<parallel>], iteration_bounds = array<i64: 2, 1>, scalar_prefetch = 0 : i64, scratch_operands = 0 : i64, tpu.core_type = #tpu.core_type<tc>, window_params = [{transform_indices = @transform_0, window_bounds = array<i64: 1, 4, 256>}, {pipeline_mode = #tpu.pipeline_mode<synchronous>, transform_indices = @transform_1, window_bounds = array<i64: 4, 4>}, {pipeline_mode = #tpu.pipeline_mode<synchronous>, transform_indices = @transform_2, window_bounds = array<i64: 4, 1>}, {transform_indices = @transform_3, window_bounds = array<i64: 1, 4, 256>}]} {
    %c0 = arith.constant 0 : index
    %c0_0 = arith.constant 0 : index
    %c0_1 = arith.constant 0 : index
    %0 = vector.load %arg2[%c0, %c0_0, %c0_1] : memref<1x4x256xf32, #tpu.memory_space<vmem>>, vector<1x4x256xf32>
    %1 = vector.shape_cast %0 : vector<1x4x256xf32> to vector<4x256xf32>
    %2 = math.absf %1 : vector<4x256xf32>
    %c0_2 = arith.constant 0 : index
    %c0_3 = arith.constant 0 : index
    %3 = vector.load %arg3[%c0_2, %c0_3] : memref<4x4xf32, #tpu.memory_space<vmem>>, vector<4x4xf32>
    %c0_4 = arith.constant 0 : index
    %c0_5 = arith.constant 0 : index
    %4 = vector.load %arg4[%c0_4, %c0_5] : memref<4x1xf32, #tpu.memory_space<vmem>>, vector<4x1xf32>
    %5 = vector.extract_strided_slice %3 {offsets = [0, 0], sizes = [4, 1], strides = [1, 1]} : vector<4x4xf32> to vector<4x1xf32>
    %6 = vector.extract_strided_slice %2 {offsets = [0, 0], sizes = [1, 256], strides = [1, 1]} : vector<4x256xf32> to vector<1x256xf32>
    %7 = vector.broadcast %5 : vector<4x1xf32> to vector<4x256xf32>
    %8 = vector.broadcast %6 : vector<1x256xf32> to vector<4x256xf32>
    %9 = arith.mulf %7, %8 : vector<4x256xf32>
    %10 = vector.broadcast %4 : vector<4x1xf32> to vector<4x256xf32>
    %11 = arith.addf %10, %9 : vector<4x256xf32>
    %12 = vector.extract_strided_slice %3 {offsets = [0, 1], sizes = [4, 1], strides = [1, 1]} : vector<4x4xf32> to vector<4x1xf32>
    %13 = vector.extract_strided_slice %2 {offsets = [1, 0], sizes = [1, 256], strides = [1, 1]} : vector<4x256xf32> to vector<1x256xf32>
    %14 = vector.broadcast %12 : vector<4x1xf32> to vector<4x256xf32>
    %15 = vector.broadcast %13 : vector<1x256xf32> to vector<4x256xf32>
    %16 = arith.mulf %14, %15 : vector<4x256xf32>
    %17 = arith.addf %11, %16 : vector<4x256xf32>
    %18 = vector.extract_strided_slice %3 {offsets = [0, 2], sizes = [4, 1], strides = [1, 1]} : vector<4x4xf32> to vector<4x1xf32>
    %19 = vector.extract_strided_slice %2 {offsets = [2, 0], sizes = [1, 256], strides = [1, 1]} : vector<4x256xf32> to vector<1x256xf32>
    %20 = vector.broadcast %18 : vector<4x1xf32> to vector<4x256xf32>
    %21 = vector.broadcast %19 : vector<1x256xf32> to vector<4x256xf32>
    %22 = arith.mulf %20, %21 : vector<4x256xf32>
    %23 = arith.addf %17, %22 : vector<4x256xf32>
    %24 = vector.extract_strided_slice %3 {offsets = [0, 3], sizes = [4, 1], strides = [1, 1]} : vector<4x4xf32> to vector<4x1xf32>
    %25 = vector.extract_strided_slice %2 {offsets = [3, 0], sizes = [1, 256], strides = [1, 1]} : vector<4x256xf32> to vector<1x256xf32>
    %26 = vector.broadcast %24 : vector<4x1xf32> to vector<4x256xf32>
    %27 = vector.broadcast %25 : vector<1x256xf32> to vector<4x256xf32>
    %28 = arith.mulf %26, %27 : vector<4x256xf32>
    %29 = arith.addf %23, %28 : vector<4x256xf32>
    %c0_6 = arith.constant 0 : index
    %c0_7 = arith.constant 0 : index
    %c0_8 = arith.constant 0 : index
    %30 = vector.load %arg5[%c0_6, %c0_7, %c0_8] : memref<1x4x256xf32, #tpu.memory_space<vmem>>, vector<1x4x256xf32>
    %31 = vector.shape_cast %30 : vector<1x4x256xf32> to vector<4x256xf32>
    %32 = vector.shape_cast %29 : vector<4x256xf32> to vector<1x4x256xf32>
    tpu.vector_store %arg5[%c0_6, %c0_7, %c0_8], %32 {strides = array<i32>} : memref<1x4x256xf32, #tpu.memory_space<vmem>>, vector<1x4x256xf32>,
    return
  }
  func.func @transform_0(%arg0: i32, %arg1: i32) -> (i32, i32, i32) {
    %c0_i32 = arith.constant 0 : i32
    %c0_i32_0 = arith.constant 0 : i32
    return %arg0, %c0_i32, %arg1 : i32, i32, i32
  }
  func.func @transform_1(%arg0: i32, %arg1: i32) -> (i32, i32) {
    %c0_i32 = arith.constant 0 : i32
    %c0_i32_0 = arith.constant 0 : i32
    %c0_i32_1 = arith.constant 0 : i32
    return %c0_i32, %c0_i32_0 : i32, i32
  }
  func.func @transform_2(%arg0: i32, %arg1: i32) -> (i32, i32) {
    %c0_i32 = arith.constant 0 : i32
    %c0_i32_0 = arith.constant 0 : i32
    %c0_i32_1 = arith.constant 0 : i32
    return %c0_i32, %c0_i32_0 : i32, i32
  }
  func.func @transform_3(%arg0: i32, %arg1: i32) -> (i32, i32, i32) {
    %c0_i32 = arith.constant 0 : i32
    %c0_i32_0 = arith.constant 0 : i32
    return %arg0, %c0_i32, %arg1 : i32, i32, i32
  }
}

</mosaic_0001>

<llo_original>
// kernel: reverse.0
$region0: #{reverse.0}
  %s0 = inlined_call_operand.vmem [shape: f32[2,4,16,7], index: 0, kind: input, shape index: {}]
  %s1 = inlined_call_operand.vmem [shape: f32[2,4,16,7], index: 1, kind: output, shape index: {}]
  $region1: #{reverse.0} parent=0
    #allocation0 [shape = 'u8[65536]{0}', space=vmem, size = 0x10000, scoped, tag = 'operand span for operand 0']
    #allocation1 [shape = 'u8[32768]{0}', space=vmem, size = 0x8000, scoped, tag = 'operand span for operand 1']
    %s2 = scalar_lea.vmem [#allocation0], 8
    // Predicated region
    $region2: #{reverse.0} parent=1 // pred_check
      _
    $region3: #{reverse.0} parent=1 // pred_check_branch
      %4 = sbr.rel (0) target = $region5
    $region4: #{reverse.0} parent=1 // pred_region
      // Predicated region
      $region6: #{reverse.0} parent=4 // pred_check
        _
      $region7: #{reverse.0} parent=4 // pred_check_branch
        %6 = sbr.rel (0) target = $region9
      $region8: #{reverse.0} parent=4 // pred_region
        // Predicated region
        $region21: #{reverse.0} parent=8 // pred_check
          _
        $region22: #{reverse.0} parent=8 // pred_check_branch
          %36 = sbr.rel (0) target = $region24
        $region23: #{reverse.0} parent=8 // pred_region
          loop: start=0, step=1, limit=1
          $region25: #{reverse.0} parent=23 // loop_pre_header
            _
          $region26: #{reverse.0} parent=23 // loop_header
            %s38 = sphi 0, %s42
            %p39 = scmp.ge.s32.totalorder %s38, 1
            %s43 = sphi %s0, %s0
            %s44 = sphi %s2, %s2
          $region27: #{reverse.0} parent=23 // loop_header_branch
            %41 = sbr.rel (%p39) target = $region31
          $region28: #{reverse.0} parent=23 // loop_body
            %v45 = vld [vmem:[%s43] sm:$0xff]
            %46 = vst [vmem:[%s44] sm:$0xff] %v45
            %v47 = vld [vmem:[%s43 + $0x8] sm:$0xff]
            %48 = vst [vmem:[%s44 + $0x10] sm:$0xff] %v47
            %v49 = vld [vmem:[%s43 + $0x10] sm:$0xff]
            %50 = vst [vmem:[%s44 + $0x20] sm:$0xff] %v49
            %v51 = vld [vmem:[%s43 + $0x18] sm:$0xff]
            %52 = vst [vmem:[%s44 + $0x30] sm:$0xff] %v51
            %v53 = vld [vmem:[%s43 + $0x20] sm:$0xff]
            %54 = vst [vmem:[%s44 + $0x40] sm:$0xff] %v53
            %v55 = vld [vmem:[%s43 + $0x28] sm:$0xff]
            %56 = vst [vmem:[%s44 + $0x50] sm:$0xff] %v55
            %v57 = vld [vmem:[%s43 + $0x30] sm:$0xff]
            %58 = vst [vmem:[%s44 + $0x60] sm:$0xff] %v57
            %v59 = vld [vmem:[%s43 + $0x38] sm:$0xff]
            %60 = vst [vmem:[%s44 + $0x70] sm:$0xff] %v59
          $region29: #{reverse.0} parent=23 // loop_footer
            %s42 = sadd.s32 1, %s38
          $region30: #{reverse.0} parent=23 // loop_footer_branch
            %37 = sbr.rel target = $region26
          $region31: #{reverse.0} parent=23 // loop_exit
            _
        $region24: #{reverse.0} parent=8 // pred_fallthru
          _
        // Predicated region
        $region32: #{reverse.0} parent=8 // pred_check
          _
        $region33: #{reverse.0} parent=8 // pred_check_branch
          %62 = sbr.rel target = $region35
        $region34: #{reverse.0} parent=8 // pred_region
          _
        $region35: #{reverse.0} parent=8 // pred_fallthru
          _
      $region9: #{reverse.0} parent=4 // pred_fallthru
        _
      // Predicated region
      $region10: #{reverse.0} parent=4 // pred_check
        _
      $region11: #{reverse.0} parent=4 // pred_check_branch
        %8 = sbr.rel target = $region13
      $region12: #{reverse.0} parent=4 // pred_region
        %s10 = ssub.s32 256, 1
        loop: start=0, step=1, limit=1
        $region14: #{reverse.0} parent=12 // loop_pre_header
          _
        $region15: #{reverse.0} parent=12 // loop_header
          %s12 = sphi 0, %s16
          %p13 = scmp.ge.s32.totalorder %s12, 1
          %s17 = sphi %s0, %s0
          %s18 = sphi %s2, %s2
        $region16: #{reverse.0} parent=12 // loop_header_branch
          %15 = sbr.rel (%p13) target = $region20
        $region17: #{reverse.0} parent=12 // loop_body
          %v19 = vld [vmem:[%s17] sm:%s10]
          %20 = vst [vmem:[%s18] sm:%s10] %v19
          %v21 = vld [vmem:[%s17 + $0x8] sm:%s10]
          %22 = vst [vmem:[%s18 + $0x10] sm:%s10] %v21
          %v23 = vld [vmem:[%s17 + $0x10] sm:%s10]
          %24 = vst [vmem:[%s18 + $0x20] sm:%s10] %v23
          %v25 = vld [vmem:[%s17 + $0x18] sm:%s10]
          %26 = vst [vmem:[%s18 + $0x30] sm:%s10] %v25
          %v27 = vld [vmem:[%s17 + $0x20] sm:%s10]
          %28 = vst [vmem:[%s18 + $0x40] sm:%s10] %v27
          %v29 = vld [vmem:[%s17 + $0x28] sm:%s10]
          %30 = vst [vmem:[%s18 + $0x50] sm:%s10] %v29
          %v31 = vld [vmem:[%s17 + $0x30] sm:%s10]
          %32 = vst [vmem:[%s18 + $0x60] sm:%s10] %v31
          %v33 = vld [vmem:[%s17 + $0x38] sm:%s10]
          %34 = vst [vmem:[%s18 + $0x70] sm:%s10] %v33
        $region18: #{reverse.0} parent=12 // loop_footer
          %s16 = sadd.s32 1, %s12
        $region19: #{reverse.0} parent=12 // loop_footer_branch
          %11 = sbr.rel target = $region15
        $region20: #{reverse.0} parent=12 // loop_exit
          _
      $region13: #{reverse.0} parent=4 // pred_fallthru
        _
    $region5: #{reverse.0} parent=1 // pred_fallthru
      _
    %63 = vnop
    %s64 = scalar_lea.vmem [#allocation0], 7
    %v65 = vld [vmem:[%s64] ss:$-1 sm:$0xff]
    %v66 = vrot.slane %v65, 1
    %67 = vst [vmem:[#allocation1] sm:$0xff] %v66
    %s68 = scalar_lea.vmem [#allocation0], 8
    %s69 = scalar_lea.vmem %s68, 7 [#allocation0]
    %v70 = vld [vmem:[%s69] ss:$-1 sm:$0xff]
    %v71 = vrot.slane %v70, 1
    %v72 = vlaneseq
    %v73 = vshrl.u32 %v72, 7
    %vm74 = vcmp.lt.s32.totalorder %v73, 7
    %75 = vst.msk [vmem:[#allocation1] sm:$0xff] %vm74, %v71
    %s76 = scalar_lea.vmem [#allocation1], 8
    %s77 = scalar_lea.vmem [#allocation0], 16
    %s78 = scalar_lea.vmem %s77, 7 [#allocation0]
    %v79 = vld [vmem:[%s78] ss:$-1 sm:$0xff]
    %v80 = vrot.slane %v79, 1
    %81 = vst [vmem:[%s76] sm:$0xff] %v80
    %s82 = scalar_lea.vmem %s77, 8 [#allocation0]
    %s83 = scalar_lea.vmem %s82, 7 [#allocation0]
    %v84 = vld [vmem:[%s83] ss:$-1 sm:$0xff]
    %v85 = vrot.slane %v84, 1
    %v86 = vlaneseq
    %v87 = vshrl.u32 %v86, 7
    %vm88 = vcmp.lt.s32.totalorder %v87, 7
    %89 = vst.msk [vmem:[%s76] sm:$0xff] %vm88, %v85
    %s90 = scalar_lea.vmem [#allocation1], 16
    %s91 = scalar_lea.vmem [#allocation0], 32
    %s92 = scalar_lea.vmem %s91, 7 [#allocation0]
    %v93 = vld [vmem:[%s92] ss:$-1 sm:$0xff]
    %v94 = vrot.slane %v93, 1
    %95 = vst [vmem:[%s90] sm:$0xff] %v94
    %s96 = scalar_lea.vmem %s91, 8 [#allocation0]
    %s97 = scalar_lea.vmem %s96, 7 [#allocation0]
    %v98 = vld [vmem:[%s97] ss:$-1 sm:$0xff]
    %v99 = vrot.slane %v98, 1
    %v100 = vlaneseq
    %v101 = vshrl.u32 %v100, 7
    %vm102 = vcmp.lt.s32.totalorder %v101, 7
    %103 = vst.msk [vmem:[%s90] sm:$0xff] %vm102, %v99
    %s104 = scalar_lea.vmem [#allocation1], 24
    %s105 = scalar_lea.vmem [#allocation0], 48
    %s106 = scalar_lea.vmem %s105, 7 [#allocation0]
    %v107 = vld [vmem:[%s106] ss:$-1 sm:$0xff]
    %v108 = vrot.slane %v107, 1
    %109 = vst [vmem:[%s104] sm:$0xff] %v108
    %s110 = scalar_lea.vmem %s105, 8 [#allocation0]
    %s111 = scalar_lea.vmem %s110, 7 [#allocation0]
    %v112 = vld [vmem:[%s111] ss:$-1 sm:$0xff]
    %v113 = vrot.slane %v112, 1
    %v114 = vlaneseq
    %v115 = vshrl.u32 %v114, 7
    %vm116 = vcmp.lt.s32.totalorder %v115, 7
    %117 = vst.msk [vmem:[%s104] sm:$0xff] %vm116, %v113
    %s118 = scalar_lea.vmem [#allocation1], 32
    %s119 = scalar_lea.vmem [#allocation0], 64
    %s120 = scalar_lea.vmem %s119, 7 [#allocation0]
    %v121 = vld [vmem:[%s120] ss:$-1 sm:$0xff]
    %v122 = vrot.slane %v121, 1
    %123 = vst [vmem:[%s118] sm:$0xff] %v122
    %s124 = scalar_lea.vmem %s119, 8 [#allocation0]
    %s125 = scalar_lea.vmem %s124, 7 [#allocation0]
    %v126 = vld [vmem:[%s125] ss:$-1 sm:$0xff]
    %v127 = vrot.slane %v126, 1
    %v128 = vlaneseq
    %v129 = vshrl.u32 %v128, 7
    %vm130 = vcmp.lt.s32.totalorder %v129, 7
    %131 = vst.msk [vmem:[%s118] sm:$0xff] %vm130, %v127
    %s132 = scalar_lea.vmem [#allocation1], 40
    %s133 = scalar_lea.vmem [#allocation0], 80
    %s134 = scalar_lea.vmem %s133, 7 [#allocation0]
    %v135 = vld [vmem:[%s134] ss:$-1 sm:$0xff]
    %v136 = vrot.slane %v135, 1
    %137 = vst [vmem:[%s132] sm:$0xff] %v136
    %s138 = scalar_lea.vmem %s133, 8 [#allocation0]
    %s139 = scalar_lea.vmem %s138, 7 [#allocation0]
    %v140 = vld [vmem:[%s139] ss:$-1 sm:$0xff]
    %v141 = vrot.slane %v140, 1
    %v142 = vlaneseq
    %v143 = vshrl.u32 %v142, 7
    %vm144 = vcmp.lt.s32.totalorder %v143, 7
    %145 = vst.msk [vmem:[%s132] sm:$0xff] %vm144, %v141
    %s146 = scalar_lea.vmem [#allocation1], 48
    %s147 = scalar_lea.vmem [#allocation0], 96
    %s148 = scalar_lea.vmem %s147, 7 [#allocation0]
    %v149 = vld [vmem:[%s148] ss:$-1 sm:$0xff]
    %v150 = vrot.slane %v149, 1
    %151 = vst [vmem:[%s146] sm:$0xff] %v150
    %s152 = scalar_lea.vmem %s147, 8 [#allocation0]
    %s153 = scalar_lea.vmem %s152, 7 [#allocation0]
    %v154 = vld [vmem:[%s153] ss:$-1 sm:$0xff]
    %v155 = vrot.slane %v154, 1
    %v156 = vlaneseq
    %v157 = vshrl.u32 %v156, 7
    %vm158 = vcmp.lt.s32.totalorder %v157, 7
    %159 = vst.msk [vmem:[%s146] sm:$0xff] %vm158, %v155
    %s160 = scalar_lea.vmem [#allocation1], 56
    %s161 = scalar_lea.vmem [#allocation0], 112
    %s162 = scalar_lea.vmem %s161, 7 [#allocation0]
    %v163 = vld [vmem:[%s162] ss:$-1 sm:$0xff]
    %v164 = vrot.slane %v163, 1
    %165 = vst [vmem:[%s160] sm:$0xff] %v164
    %s166 = scalar_lea.vmem %s161, 8 [#allocation0]
    %s167 = scalar_lea.vmem %s166, 7 [#allocation0]
    %v168 = vld [vmem:[%s167] ss:$-1 sm:$0xff]
    %v169 = vrot.slane %v168, 1
    %v170 = vlaneseq
    %v171 = vshrl.u32 %v170, 7
    %vm172 = vcmp.lt.s32.totalorder %v171, 7
    %173 = vst.msk [vmem:[%s160] sm:$0xff] %vm172, %v169
    // Predicated region
    $region36: #{reverse.0} parent=1 // pred_check
      _
    $region37: #{reverse.0} parent=1 // pred_check_branch
      %175 = sbr.rel (0) target = $region39
    $region38: #{reverse.0} parent=1 // pred_region
      // Predicated region
      $region40: #{reverse.0} parent=38 // pred_check
        _
      $region41: #{reverse.0} parent=38 // pred_check_branch
        %177 = sbr.rel (0) target = $region43
      $region42: #{reverse.0} parent=38 // pred_region
        // Predicated region
        $region55: #{reverse.0} parent=42 // pred_check
          _
        $region56: #{reverse.0} parent=42 // pred_check_branch
          %207 = sbr.rel (0) target = $region58
        $region57: #{reverse.0} parent=42 // pred_region
          loop: start=0, step=1, limit=1
          $region59: #{reverse.0} parent=57 // loop_pre_header
            _
          $region60: #{reverse.0} parent=57 // loop_header
            %s209 = sphi 0, %s213
            %p210 = scmp.ge.s32.totalorder %s209, 1
            %s214 = sphi [#allocation1], [#allocation1]
            %s215 = sphi %s1, %s1
          $region61: #{reverse.0} parent=57 // loop_header_branch
            %212 = sbr.rel (%p210) target = $region65
          $region62: #{reverse.0} parent=57 // loop_body
            %v216 = vld [vmem:[%s214] sm:$0xff]
            %217 = vst [vmem:[%s215] sm:$0xff] %v216
            %v218 = vld [vmem:[%s214 + $0x8] sm:$0xff]
            %219 = vst [vmem:[%s215 + $0x8] sm:$0xff] %v218
            %v220 = vld [vmem:[%s214 + $0x10] sm:$0xff]
            %221 = vst [vmem:[%s215 + $0x10] sm:$0xff] %v220
            %v222 = vld [vmem:[%s214 + $0x18] sm:$0xff]
            %223 = vst [vmem:[%s215 + $0x18] sm:$0xff] %v222
            %v224 = vld [vmem:[%s214 + $0x20] sm:$0xff]
            %225 = vst [vmem:[%s215 + $0x20] sm:$0xff] %v224
            %v226 = vld [vmem:[%s214 + $0x28] sm:$0xff]
            %227 = vst [vmem:[%s215 + $0x28] sm:$0xff] %v226
            %v228 = vld [vmem:[%s214 + $0x30] sm:$0xff]
            %229 = vst [vmem:[%s215 + $0x30] sm:$0xff] %v228
            %v230 = vld [vmem:[%s214 + $0x38] sm:$0xff]
            %231 = vst [vmem:[%s215 + $0x38] sm:$0xff] %v230
          $region63: #{reverse.0} parent=57 // loop_footer
            %s213 = sadd.s32 1, %s209
          $region64: #{reverse.0} parent=57 // loop_footer_branch
            %208 = sbr.rel target = $region60
          $region65: #{reverse.0} parent=57 // loop_exit
            _
        $region58: #{reverse.0} parent=42 // pred_fallthru
          _
        // Predicated region
        $region66: #{reverse.0} parent=42 // pred_check
          _
        $region67: #{reverse.0} parent=42 // pred_check_branch
          %233 = sbr.rel target = $region69
        $region68: #{reverse.0} parent=42 // pred_region
          _
        $region69: #{reverse.0} parent=42 // pred_fallthru
          _
      $region43: #{reverse.0} parent=38 // pred_fallthru
        _
      // Predicated region
      $region44: #{reverse.0} parent=38 // pred_check
        _
      $region45: #{reverse.0} parent=38 // pred_check_branch
        %179 = sbr.rel target = $region47
      $region46: #{reverse.0} parent=38 // pred_region
        %s181 = ssub.s32 256, 1
        loop: start=0, step=1, limit=1
        $region48: #{reverse.0} parent=46 // loop_pre_header
          _
        $region49: #{reverse.0} parent=46 // loop_header
          %s183 = sphi 0, %s187
          %p184 = scmp.ge.s32.totalorder %s183, 1
          %s188 = sphi [#allocation1], [#allocation1]
          %s189 = sphi %s1, %s1
        $region50: #{reverse.0} parent=46 // loop_header_branch
          %186 = sbr.rel (%p184) target = $region54
        $region51: #{reverse.0} parent=46 // loop_body
          %v190 = vld [vmem:[%s188] sm:%s181]
          %191 = vst [vmem:[%s189] sm:%s181] %v190
          %v192 = vld [vmem:[%s188 + $0x8] sm:%s181]
          %193 = vst [vmem:[%s189 + $0x8] sm:%s181] %v192
          %v194 = vld [vmem:[%s188 + $0x10] sm:%s181]
          %195 = vst [vmem:[%s189 + $0x10] sm:%s181] %v194
          %v196 = vld [vmem:[%s188 + $0x18] sm:%s181]
          %197 = vst [vmem:[%s189 + $0x18] sm:%s181] %v196
          %v198 = vld [vmem:[%s188 + $0x20] sm:%s181]
          %199 = vst [vmem:[%s189 + $0x20] sm:%s181] %v198
          %v200 = vld [vmem:[%s188 + $0x28] sm:%s181]
          %201 = vst [vmem:[%s189 + $0x28] sm:%s181] %v200
          %v202 = vld [vmem:[%s188 + $0x30] sm:%s181]
          %203 = vst [vmem:[%s189 + $0x30] sm:%s181] %v202
          %v204 = vld [vmem:[%s188 + $0x38] sm:%s181]
          %205 = vst [vmem:[%s189 + $0x38] sm:%s181] %v204
        $region52: #{reverse.0} parent=46 // loop_footer
          %s187 = sadd.s32 1, %s183
        $region53: #{reverse.0} parent=46 // loop_footer_branch
          %182 = sbr.rel target = $region49
        $region54: #{reverse.0} parent=46 // loop_exit
          _
      $region47: #{reverse.0} parent=38 // pred_fallthru
        _
    $region39: #{reverse.0} parent=1 // pred_fallthru
      _
    %234 = vnop

</llo_original>
